<compile_context>
chip_gen: v6e
topology: v6e:2x2x1
jax: 0.10.0
libtpu: 0.0.40
codegen_flags: <defaults>
</compile_context>

<pallas_src>
import functools

import jax
import jax.numpy as jnp
from jax.experimental import pallas as pl
from jax.experimental.pallas import tpu as pltpu

C1 = 0.01 ** 2
C2 = 0.03 ** 2


def gaussian_1d(window_size: int, sigma: float) -> jnp.ndarray:
    """Same as SSIMLoss.gaussian: normalized 1D gaussian of length window_size."""
    x = jnp.arange(window_size, dtype=jnp.float32)
    g = jnp.exp(-((x - window_size // 2) ** 2) / (2.0 * sigma ** 2))
    return g / jnp.sum(g)


def band_matrix(n: int, g: jnp.ndarray, pad: int) -> jnp.ndarray:
    """M[i, m] = g[m - i + pad] if |m - i| <= pad else 0.  Right/left multiply by
    M == zero-padded 'same' 1D conv with g (g symmetric, so M is symmetric)."""
    idx = jnp.arange(n)
    diff = idx[None, :] - idx[:, None] + pad
    valid = (diff >= 0) & (diff < g.shape[0])
    return jnp.where(valid, g[jnp.clip(diff, 0, g.shape[0] - 1)], 0.0).astype(jnp.float32)


def _device_info():
    """(vmem_capacity_bytes, tensorcores_per_chip, mxu_lane_target), safe fallbacks."""
    vmem_cap = 64 * 1024 * 1024          # conservative (v7x-sized) default
    num_tc = 1
    lane_target = 128
    try:
        info = pltpu.get_tpu_info()
        vmem_cap = int(getattr(info, "vmem_capacity_bytes", vmem_cap))
    except Exception:
        pass
    try:
        kind = jax.devices()[0].device_kind.lower()
        if "v7" in kind:
            num_tc = 2                   # v7x: 2 TensorCores share the parallel axis
        if ("v6" in kind) or ("v7" in kind):
            lane_target = 256            # 256-wide MXU on v6e / v7x
    except Exception:
        pass
    return vmem_cap, num_tc, lane_target


def _choose_pack(w: int, bc: int, lane_target: int, num_tc: int) -> int:
    """How many (b, c) planes to pack side-by-side along the lane (W) axis."""
    if w >= lane_target:
        return 1
    g = max(1, lane_target // w)
    g = min(g, max(1, bc))               # never pad BC by more than ~2x
    # v7x: keep >= 2 packed super-planes so both TensorCores get work.
    while num_tc >= 2 and g > 1 and (bc + g - 1) // g < 2:
        g //= 2
    return max(1, g)


def _choose_tile(ns: int, h: int, wp: int, in_itemsize: int,
                 budget_bytes: int, num_tc: int) -> int:
    """Number of packed super-planes processed per grid step."""
    # ~32 live f32 (H, Wp) temporaries per super-plane (x, y, 5-way staging,
    # col conv, transposed copy, row conv, SSIM-map intermediates) plus the
    # double-buffered input DMA blocks.
    per_sp = 32 * h * wp * 4 + 4 * h * wp * in_itemsize + 4096
    p = max(1, min(ns, budget_bytes // per_sp))
    if num_tc >= 2 and ns >= 2:
        nb = -(-ns // p)
        if nb == 1:
            p = -(-ns // 2)              # at least one step per TensorCore
        elif nb % 2 == 1:
            # best effort: prefer an even step count so no core idles on the tail
            for cand in range(p, 0, -1):
                if (-(-ns // cand)) % 2 == 0:
                    p = cand
                    break
    return max(1, p)


def _ssim_kernel(a_ref, bm_ref, x_ref, y_ref, out_ref, stage_ref, *, g_pack, w_orig):
    """One block of P packed super-planes: fused gaussian convs, SSIM map, sums."""
    A = a_ref[...]                              # (H, H) gaussian band (symmetric)
    Bm = bm_ref[...]                            # (Wp, Wp) block-diag gaussian band
    x = x_ref[...].astype(jnp.float32)          # (P, H, Wp), cast in-kernel
    y = y_ref[...].astype(jnp.float32)
    p, h, wp = x.shape

    # Stage the 5 conv operands straight into one contiguous VMEM scratch
    # (avoids the extra copy pass a jnp.concatenate would do).
    stage_ref[0 * p:1 * p] = x
    stage_ref[1 * p:2 * p] = y
    stage_ref[2 * p:3 * p] = x * x
    stage_ref[3 * p:4 * p] = y * y
    stage_ref[4 * p:5 * p] = x * y
    stacked = stage_ref[...]                    # (5P, H, Wp)

    # Conv along W: one contiguous (5P*H, Wp) @ (Wp, Wp) matmul, lane-dense N/K.
    # (reshape is layout-preserving when H is a multiple of 8.)
    col = jnp.dot(stacked.reshape(5 * p * h, wp), Bm,
                  preferred_element_type=jnp.float32).reshape(5 * p, h, wp)

    # Conv along H: single XLU transpose, then ONE big-M (5P*Wp, H) @ (H, H)
    # matmul (A is symmetric, so no .T needed).  No per-plane broadcast of A.
    colT = jnp.transpose(col, (0, 2, 1))        # (5P, Wp, H)
    conv = jnp.dot(colT.reshape(5 * p * wp, h), A,
                   preferred_element_type=jnp.float32).reshape(5 * p, wp, h)

    mu1 = conv[0 * p:1 * p]
    mu2 = conv[1 * p:2 * p]
    ex2 = conv[2 * p:3 * p]
    ey2 = conv[3 * p:4 * p]
    exy = conv[4 * p:5 * p]

    mu1_sq = mu1 * mu1
    mu2_sq = mu2 * mu2
    mu1_mu2 = mu1 * mu2
    sigma1_sq = ex2 - mu1_sq
    sigma2_sq = ey2 - mu2_sq
    sigma12 = exy - mu1_mu2

    num = (2.0 * mu1_mu2 + C1) * (2.0 * sigma12 + C2)
    den = (mu1_sq + mu2_sq + C1) * (sigma1_sq + sigma2_sq + C2)
    # EUP approx reciprocal + one Newton-Raphson step (den >= C1*C2 > 0), keeps
    # the divide off the VALU critical path while restoring ~f32 accuracy.
    r = pl.reciprocal(den, approx=True)
    r = r * (2.0 - den * r)
    ssim_map = num * r                          # (P, Wp, H) — orientation-agnostic

    # Per-original-plane spatial sums: split the packed lane-group axis back
    # into (G, W), reduce over H (lanes) then W.  Output block is tiny.
    sums = jnp.sum(ssim_map.reshape(p, g_pack, w_orig, h), axis=-1)   # (P, G, W)
    out_ref[0] = jnp.sum(sums, axis=-1)                               # (P, G)


def ssim_loss(img1, img2, window_size: int = 11, size_average: bool = True):
    """Pallas equivalent of SSIMLoss.forward: returns 1 - SSIM."""
    B, C, H, W = img1.shape
    BC = B * C
    pad = window_size // 2
    g1d = gaussian_1d(window_size, 1.5)

    vmem_cap, num_tc, lane_target = _device_info()
    G = _choose_pack(W, BC, lane_target, num_tc)
    Wp = G * W

    A = band_matrix(H, g1d, pad)                                   # (H, H)
    bw = band_matrix(W, g1d, pad)                                  # (W, W)
    Bm = jnp.kron(jnp.eye(G, dtype=jnp.float32), bw) if G > 1 else bw   # (Wp, Wp)

    # Lane packing (wrapper-side layout plumbing, native dtype preserved):
    # (BC, H, W) -> (NS, H, G*W), zero-padding BC up to a multiple of G.
    def pack(img):
        xs = img.reshape(BC, H, W)
        if G == 1:
            return xs
        bcp = ((BC + G - 1) // G) * G
        if bcp != BC:
            xs = jnp.concatenate(
                [xs, jnp.zeros((bcp - BC, H, W), xs.dtype)], axis=0)
        return xs.reshape(bcp // G, G, H, W).transpose(0, 2, 1, 3).reshape(bcp // G, H, Wp)

    x = pack(img1)
    y = pack(img2)
    NS = x.shape[0]

    # Generation-aware VMEM budget (raised well above the old 4 MiB heuristic).
    vmem_limit = int(min(vmem_cap // 2, 64 * 1024 * 1024))
    budget = vmem_limit // 2 - (Wp * Wp + H * H) * 8
    P = _choose_tile(NS, H, Wp, img1.dtype.itemsize, budget, num_tc)
    n_blocks = -(-NS // P)
    ns_pad = n_blocks * P
    if ns_pad != NS:
        zpad = jnp.zeros((ns_pad - NS, H, Wp), x.dtype)
        x = jnp.concatenate([x, zpad], axis=0)
        y = jnp.concatenate([y, zpad], axis=0)

    kernel = functools.partial(_ssim_kernel, g_pack=G, w_orig=W)
    per_plane = pl.pallas_call(
        kernel,
        out_shape=jax.ShapeDtypeStruct((n_blocks, P, G), jnp.float32),
        grid=(n_blocks,),
        in_specs=[
            pl.BlockSpec((H, H), lambda i: (0, 0)),
            pl.BlockSpec((Wp, Wp), lambda i: (0, 0)),
            pl.BlockSpec((P, H, Wp), lambda i: (i, 0, 0)),
            pl.BlockSpec((P, H, Wp), lambda i: (i, 0, 0)),
        ],
        out_specs=pl.BlockSpec((1, P, G), lambda i: (i, 0, 0)),
        scratch_shapes=[pltpu.VMEM((5 * P, H, Wp), jnp.float32)],
        compiler_params=pltpu.CompilerParams(
            dimension_semantics=("parallel",),
            vmem_limit_bytes=vmem_limit),
    )(A, Bm, x, y)

    # (n_blocks, P, G) flattened in (super-plane, sub-plane) order == original
    # (b, c) plane order; padded planes are dropped by [:BC].
    sums = per_plane.reshape(ns_pad * G)[:BC].reshape(B, C)
    per_plane_mean = sums / float(H * W)                           # (B, C)
    if size_average:
        ssim_value = jnp.mean(per_plane_mean)                      # scalar
    else:
        ssim_value = jnp.mean(per_plane_mean, axis=1)              # (B,) == mean(1).mean(1).mean(1)
    return 1.0 - ssim_value


# ---------------- pure-JAX reference (for correctness check) ----------------
def _ref_ssim_loss(img1, img2, window_size=11, size_average=True):
    B, C, H, W = img1.shape
    pad = window_size // 2
    g = gaussian_1d(window_size, 1.5)
    w2d = jnp.outer(g, g)
    window = jnp.broadcast_to(w2d, (C, 1, window_size, window_size)).astype(jnp.float32)

    def conv(xx):
        return jax.lax.conv_general_dilated(
            xx, window, window_strides=(1, 1), padding=[(pad, pad), (pad, pad)],
            dimension_numbers=("NCHW", "OIHW", "NCHW"), feature_group_count=C)

    mu1, mu2 = conv(img1), conv(img2)
    mu1_sq, mu2_sq, mu1_mu2 = mu1 ** 2, mu2 ** 2, mu1 * mu2
    s1 = conv(img1 * img1) - mu1_sq
    s2 = conv(img2 * img2) - mu2_sq
    s12 = conv(img1 * img2) - mu1_mu2
    ssim_map = (2 * mu1_mu2 + C1) * (2 * s12 + C2) / ((mu1_sq + mu2_sq + C1) * (s1 + s2 + C2))
    if size_average:
        return 1.0 - jnp.mean(ssim_map)
    return 1.0 - jnp.mean(ssim_map, axis=(1, 2, 3))


if __name__ == "__main__":
    key = jax.random.PRNGKey(0)
    k1, k2 = jax.random.split(key)
    B, C, H, W = 2, 4, 16, 16
    img1 = jax.random.uniform(k1, (B, C, H, W), dtype=jnp.float32)
    img2 = jax.random.uniform(k2, (B, C, H, W), dtype=jnp.float32)

    loss = jax.block_until_ready(ssim_loss(img1, img2, window_size=11, size_average=True))
    ref = jax.block_until_ready(_ref_ssim_loss(img1, img2, window_size=11, size_average=True))
    assert jnp.allclose(loss, ref, atol=1e-5, rtol=1e-5), (loss, ref)

    # also exercise size_average=False path
    loss_vec = jax.block_until_ready(ssim_loss(img1, img2, size_average=False))
    ref_vec = _ref_ssim_loss(img1, img2, size_average=False)
    assert jnp.allclose(loss_vec, ref_vec, atol=1e-5, rtol=1e-5), (loss_vec, ref_vec)

    print("KERNEL_OK")
</pallas_src>

<mosaic_0001>
module attributes {stable_mosaic.version = 11 : i64} {
  func.func @_ssim_kernel(%arg0: i32, %arg1: memref<16x16xf32, #tpu.memory_space<vmem>>, %arg2: memref<128x128xf32, #tpu.memory_space<vmem>>, %arg3: memref<1x16x128xf32, #tpu.memory_space<vmem>>, %arg4: memref<1x16x128xf32, #tpu.memory_space<vmem>>, %arg5: memref<1x1x8xf32, #tpu.memory_space<vmem>>, %arg6: memref<5x16x128xf32, #tpu.memory_space<vmem>>) attributes {dimension_semantics = [#tpu.dimension_semantics<parallel>], iteration_bounds = array<i64: 1>, scalar_prefetch = 0 : i64, scratch_operands = 1 : i64, tpu.core_type = #tpu.core_type<tc>, window_params = [{pipeline_mode = #tpu.pipeline_mode<synchronous>, transform_indices = @transform_0, window_bounds = array<i64: 16, 16>}, {pipeline_mode = #tpu.pipeline_mode<synchronous>, transform_indices = @transform_1, window_bounds = array<i64: 128, 128>}, {transform_indices = @transform_2, window_bounds = array<i64: 1, 16, 128>}, {transform_indices = @transform_3, window_bounds = array<i64: 1, 16, 128>}, {transform_indices = @transform_4, window_bounds = array<i64: 1, 1, 8>}]} {
    %c0 = arith.constant 0 : index
    %c0_0 = arith.constant 0 : index
    %0 = vector.load %arg1[%c0, %c0_0] : memref<16x16xf32, #tpu.memory_space<vmem>>, vector<16x16xf32>
    %c0_1 = arith.constant 0 : index
    %c0_2 = arith.constant 0 : index
    %1 = vector.load %arg2[%c0_1, %c0_2] : memref<128x128xf32, #tpu.memory_space<vmem>>, vector<128x128xf32>
    %c0_3 = arith.constant 0 : index
    %c0_4 = arith.constant 0 : index
    %c0_5 = arith.constant 0 : index
    %2 = vector.load %arg3[%c0_3, %c0_4, %c0_5] : memref<1x16x128xf32, #tpu.memory_space<vmem>>, vector<1x16x128xf32>
    %c0_6 = arith.constant 0 : index
    %c0_7 = arith.constant 0 : index
    %c0_8 = arith.constant 0 : index
    %3 = vector.load %arg4[%c0_6, %c0_7, %c0_8] : memref<1x16x128xf32, #tpu.memory_space<vmem>>, vector<1x16x128xf32>
    %c0_9 = arith.constant 0 : index
    %c0_10 = arith.constant 0 : index
    %c0_11 = arith.constant 0 : index
    %4 = vector.load %arg6[%c0_9, %c0_10, %c0_11] : memref<5x16x128xf32, #tpu.memory_space<vmem>>, vector<1x16x128xf32>
    tpu.vector_store %arg6[%c0_9, %c0_10, %c0_11], %2 {strides = array<i32>} : memref<5x16x128xf32, #tpu.memory_space<vmem>>, vector<1x16x128xf32>,
    %c1 = arith.constant 1 : index
    %c0_12 = arith.constant 0 : index
    %c0_13 = arith.constant 0 : index
    %5 = vector.load %arg6[%c1, %c0_12, %c0_13] : memref<5x16x128xf32, #tpu.memory_space<vmem>>, vector<1x16x128xf32>
    tpu.vector_store %arg6[%c1, %c0_12, %c0_13], %3 {strides = array<i32>} : memref<5x16x128xf32, #tpu.memory_space<vmem>>, vector<1x16x128xf32>,
    %6 = arith.mulf %2, %2 : vector<1x16x128xf32>
    %c2 = arith.constant 2 : index
    %c0_14 = arith.constant 0 : index
    %c0_15 = arith.constant 0 : index
    %7 = vector.load %arg6[%c2, %c0_14, %c0_15] : memref<5x16x128xf32, #tpu.memory_space<vmem>>, vector<1x16x128xf32>
    tpu.vector_store %arg6[%c2, %c0_14, %c0_15], %6 {strides = array<i32>} : memref<5x16x128xf32, #tpu.memory_space<vmem>>, vector<1x16x128xf32>,
    %8 = arith.mulf %3, %3 : vector<1x16x128xf32>
    %c3 = arith.constant 3 : index
    %c0_16 = arith.constant 0 : index
    %c0_17 = arith.constant 0 : index
    %9 = vector.load %arg6[%c3, %c0_16, %c0_17] : memref<5x16x128xf32, #tpu.memory_space<vmem>>, vector<1x16x128xf32>
    tpu.vector_store %arg6[%c3, %c0_16, %c0_17], %8 {strides = array<i32>} : memref<5x16x128xf32, #tpu.memory_space<vmem>>, vector<1x16x128xf32>,
    %10 = arith.mulf %2, %3 : vector<1x16x128xf32>
    %c4 = arith.constant 4 : index
    %c0_18 = arith.constant 0 : index
    %c0_19 = arith.constant 0 : index
    %11 = vector.load %arg6[%c4, %c0_18, %c0_19] : memref<5x16x128xf32, #tpu.memory_space<vmem>>, vector<1x16x128xf32>
    tpu.vector_store %arg6[%c4, %c0_18, %c0_19], %10 {strides = array<i32>} : memref<5x16x128xf32, #tpu.memory_space<vmem>>, vector<1x16x128xf32>,
    %c0_20 = arith.constant 0 : index
    %c0_21 = arith.constant 0 : index
    %c0_22 = arith.constant 0 : index
    %12 = vector.load %arg6[%c0_20, %c0_21, %c0_22] : memref<5x16x128xf32, #tpu.memory_space<vmem>>, vector<5x16x128xf32>
    %13 = vector.shape_cast %12 : vector<5x16x128xf32> to vector<80x128xf32>
    %cst = arith.constant dense<0.000000e+00> : vector<80x128xf32>
    %14 = tpu.matmul %13, %1, %cst {dimension_numbers = #tpu.dot_dimension_numbers<[1], [0], [0], [1], [0, 0, 1, 1], [], []>} : vector<80x128xf32>, vector<128x128xf32>, vector<80x128xf32> -> vector<80x128xf32>
    %15 = vector.shape_cast %14 : vector<80x128xf32> to vector<5x16x128xf32>
    %16 = tpu.transpose %15, [0, 2, 1] : vector<5x16x128xf32> -> vector<5x128x16xf32>
    %17 = vector.shape_cast %16 : vector<5x128x16xf32> to vector<640x16xf32>
    %cst_23 = arith.constant dense<0.000000e+00> : vector<640x16xf32>
    %18 = tpu.matmul %17, %0, %cst_23 {dimension_numbers = #tpu.dot_dimension_numbers<[1], [0], [0], [1], [0, 0, 1, 1], [], []>} : vector<640x16xf32>, vector<16x16xf32>, vector<640x16xf32> -> vector<640x16xf32>
    %19 = vector.shape_cast %18 : vector<640x16xf32> to vector<5x128x16xf32>
    %20 = vector.extract_strided_slice %19 {offsets = [0, 0, 0], sizes = [1, 128, 16], strides = [1, 1, 1]} : vector<5x128x16xf32> to vector<1x128x16xf32>
    %21 = vector.extract_strided_slice %19 {offsets = [1, 0, 0], sizes = [1, 128, 16], strides = [1, 1, 1]} : vector<5x128x16xf32> to vector<1x128x16xf32>
    %22 = vector.extract_strided_slice %19 {offsets = [2, 0, 0], sizes = [1, 128, 16], strides = [1, 1, 1]} : vector<5x128x16xf32> to vector<1x128x16xf32>
    %23 = vector.extract_strided_slice %19 {offsets = [3, 0, 0], sizes = [1, 128, 16], strides = [1, 1, 1]} : vector<5x128x16xf32> to vector<1x128x16xf32>
    %24 = vector.extract_strided_slice %19 {offsets = [4, 0, 0], sizes = [1, 128, 16], strides = [1, 1, 1]} : vector<5x128x16xf32> to vector<1x128x16xf32>
    %25 = arith.mulf %20, %20 : vector<1x128x16xf32>
    %26 = arith.mulf %21, %21 : vector<1x128x16xf32>
    %27 = arith.mulf %20, %21 : vector<1x128x16xf32>
    %28 = arith.subf %22, %25 : vector<1x128x16xf32>
    %29 = arith.subf %23, %26 : vector<1x128x16xf32>
    %30 = arith.subf %24, %27 : vector<1x128x16xf32>
    %cst_24 = arith.constant 2.000000e+00 : f32
    %31 = vector.broadcast %cst_24 : f32 to vector<1x128x16xf32>
    %32 = arith.mulf %31, %27 : vector<1x128x16xf32>
    %cst_25 = arith.constant 9.99999974E-5 : f32
    %33 = vector.broadcast %cst_25 : f32 to vector<1x128x16xf32>
    %34 = arith.addf %32, %33 : vector<1x128x16xf32>
    %cst_26 = arith.constant 2.000000e+00 : f32
    %35 = vector.broadcast %cst_26 : f32 to vector<1x128x16xf32>
    %36 = arith.mulf %35, %30 : vector<1x128x16xf32>
    %cst_27 = arith.constant 8.99999984E-4 : f32
    %37 = vector.broadcast %cst_27 : f32 to vector<1x128x16xf32>
    %38 = arith.addf %36, %37 : vector<1x128x16xf32>
    %39 = arith.mulf %34, %38 : vector<1x128x16xf32>
    %40 = arith.addf %25, %26 : vector<1x128x16xf32>
    %cst_28 = arith.constant 9.99999974E-5 : f32
    %41 = vector.broadcast %cst_28 : f32 to vector<1x128x16xf32>
    %42 = arith.addf %40, %41 : vector<1x128x16xf32>
    %43 = arith.addf %28, %29 : vector<1x128x16xf32>
    %cst_29 = arith.constant 8.99999984E-4 : f32
    %44 = vector.broadcast %cst_29 : f32 to vector<1x128x16xf32>
    %45 = arith.addf %43, %44 : vector<1x128x16xf32>
    %46 = arith.mulf %42, %45 : vector<1x128x16xf32>
    %47 = tpu.reciprocal %46 {approx = true} : vector<1x128x16xf32> -> vector<1x128x16xf32>
    %48 = arith.mulf %46, %47 : vector<1x128x16xf32>
    %cst_30 = arith.constant 2.000000e+00 : f32
    %49 = vector.broadcast %cst_30 : f32 to vector<1x128x16xf32>
    %50 = arith.subf %49, %48 : vector<1x128x16xf32>
    %51 = arith.mulf %47, %50 : vector<1x128x16xf32>
    %52 = arith.mulf %39, %51 : vector<1x128x16xf32>
    %53 = vector.shape_cast %52 : vector<1x128x16xf32> to vector<1x8x16x16xf32>
    %cst_31 = arith.constant dense<0.000000e+00> : vector<1x8x16xf32>
    %54 = vector.multi_reduction <add>, %53, %cst_31 [3] : vector<1x8x16x16xf32> to vector<1x8x16xf32>
    %cst_32 = arith.constant dense<0.000000e+00> : vector<1x8xf32>
    %55 = vector.multi_reduction <add>, %54, %cst_32 [2] : vector<1x8x16xf32> to vector<1x8xf32>
    %c0_33 = arith.constant 0 : index
    %c0_34 = arith.constant 0 : index
    %c0_35 = arith.constant 0 : index
    %56 = vector.load %arg5[%c0_33, %c0_34, %c0_35] : memref<1x1x8xf32, #tpu.memory_space<vmem>>, vector<1x1x8xf32>
    %57 = vector.shape_cast %56 : vector<1x1x8xf32> to vector<1x8xf32>
    %58 = vector.shape_cast %55 : vector<1x8xf32> to vector<1x1x8xf32>
    tpu.vector_store %arg5[%c0_33, %c0_34, %c0_35], %58 {strides = array<i32>} : memref<1x1x8xf32, #tpu.memory_space<vmem>>, vector<1x1x8xf32>,
    return
  }
  func.func @transform_0(%arg0: i32) -> (i32, i32) {
    %c0_i32 = arith.constant 0 : i32
    %c0_i32_0 = arith.constant 0 : i32
    %c0_i32_1 = arith.constant 0 : i32
    return %c0_i32, %c0_i32_0 : i32, i32
  }
  func.func @transform_1(%arg0: i32) -> (i32, i32) {
    %c0_i32 = arith.constant 0 : i32
    %c0_i32_0 = arith.constant 0 : i32
    %c0_i32_1 = arith.constant 0 : i32
    return %c0_i32, %c0_i32_0 : i32, i32
  }
  func.func @transform_2(%arg0: i32) -> (i32, i32, i32) {
    %c0_i32 = arith.constant 0 : i32
    %c0_i32_0 = arith.constant 0 : i32
    %c0_i32_1 = arith.constant 0 : i32
    return %arg0, %c0_i32, %c0_i32_0 : i32, i32, i32
  }
  func.func @transform_3(%arg0: i32) -> (i32, i32, i32) {
    %c0_i32 = arith.constant 0 : i32
    %c0_i32_0 = arith.constant 0 : i32
    %c0_i32_1 = arith.constant 0 : i32
    return %arg0, %c0_i32, %c0_i32_0 : i32, i32, i32
  }
  func.func @transform_4(%arg0: i32) -> (i32, i32, i32) {
    %c0_i32 = arith.constant 0 : i32
    %c0_i32_0 = arith.constant 0 : i32
    %c0_i32_1 = arith.constant 0 : i32
    return %arg0, %c0_i32, %c0_i32_0 : i32, i32, i32
  }
}

</mosaic_0001>

<llo_original>
// kernel: tpu_custom_call.1
$region0: #{tpu_custom_call.1}
  #allocation0 [shape = 'u32[]', space=smem, size = 0x4, offset = 0x4, fixed_abs, tag = 'smem constant byte address 0x4 - core index']
  #allocation1 [shape = 'u32[144,128]{1,0:T(1,128)}', space=vmem, size = 0x12000, scoped, tag = 'internal scratch']
  #allocation2 [shape = 'f32[5,16,128]{2,1,0:T(8,128)}', space=vmem, size = 0xa000, scoped, tag = 'scratch operand']
  %s0 = inlined_call_operand.hbm [shape: f32[16,16], index: 0, kind: input, shape index: {}]
  %s1 = inlined_call_operand.hbm [shape: f32[128,128], index: 1, kind: input, shape index: {}]
  %s2 = inlined_call_operand.hbm [shape: f32[1,16,128], index: 2, kind: input, shape index: {}]
  %s3 = inlined_call_operand.hbm [shape: f32[1,16,128], index: 3, kind: input, shape index: {}]
  %s4 = inlined_call_operand.hbm [shape: f32[1,1,8], index: 4, kind: output, shape index: {}]
  %s5 = sld [smem:[#allocation0]]
  $region42: #{tpu_custom_call.1} parent=0
    _
  %s7 = ssub.s32 1, %s5
  %s8 = scalar_select 0, %s7, %s5
  $region1: #{tpu_custom_call.1} parent=0
    #allocation3 [shape = 'u8[8192]{0}', space=vmem, size = 0x2000, scoped, tag = 'input window, operand 0, single buffered']
    #allocation4 [shape = 's32[1]{0}', space=sflag, size = 0x4, scoped, tag = 'scoped memory for tpu_custom_call.1']
    #allocation5 [shape = 's32[1]{0}', space=sflag, size = 0x4, scoped, tag = 'scoped memory for tpu_custom_call.1']
    #allocation6 [shape = 'u8[65536]{0}', space=vmem, size = 0x10000, scoped, tag = 'input window, operand 1, single buffered']
    #allocation7 [shape = 's32[1]{0}', space=sflag, size = 0x4, scoped, tag = 'scoped memory for tpu_custom_call.1']
    #allocation8 [shape = 'u8[8192]{0}', space=vmem, size = 0x2000, scoped, tag = 'input window, operand 2, single buffered']
    #allocation9 [shape = 'u8[8192]{0}', space=vmem, size = 0x2000, scoped, tag = 'input window, operand 3, single buffered']
    #allocation10 [shape = 's32[1]{0}', space=sflag, size = 0x4, scoped, tag = 'scoped memory for tpu_custom_call.1']
    #allocation11 [shape = 'u8[512]{0}', space=vmem, size = 0x400, scoped, tag = 'output window, operand 0, single buffered']
    %9 = vsyncpa [#allocation4], 0
    %10 = vsyncpa [#allocation7], 0
    %11 = vsyncpa [#allocation10], 0
    %12 = vsyncpa [#allocation5], 0
    // Predicated region
    $region2: #{tpu_custom_call.1} parent=1 // pred_check
      _
    $region3: #{tpu_custom_call.1} parent=1 // pred_check_branch
      %14 = sbr.rel (0) target = $region5
    $region4: #{tpu_custom_call.1} parent=1 // pred_region
      %s16 = ssub.s32 256, 256
      %17 = vsyncadd [#allocation4], %s16
      %s18 = sshll.u32 [#allocation3], 4
      %s19 = int_to_ptr.vmem [resolvable:$true] %s18
      %24 = dma.hbm_to_vmem [thread:$0]  %s0, 256, %s19, [#allocation4], 128, 128, 8
    $region5: #{tpu_custom_call.1} parent=1 // pred_fallthru
      _
    // Predicated region
    $region6: #{tpu_custom_call.1} parent=1 // pred_check
      _
    $region7: #{tpu_custom_call.1} parent=1 // pred_check_branch
      %26 = sbr.rel (0) target = $region9
    $region8: #{tpu_custom_call.1} parent=1 // pred_region
      %s28 = ssub.s32 2048, 2048
      %29 = vsyncadd [#allocation7], %s28
      %s30 = sshll.u32 [#allocation6], 4
      %s31 = int_to_ptr.vmem [resolvable:$true] %s30
      %36 = dma.hbm_to_vmem [thread:$0]  %s1, 2048, %s31, [#allocation7], 128, 128, 8
    $region9: #{tpu_custom_call.1} parent=1 // pred_fallthru
      _
    // Predicated region
    $region10: #{tpu_custom_call.1} parent=1 // pred_check
      _
    $region11: #{tpu_custom_call.1} parent=1 // pred_check_branch
      %38 = sbr.rel (0) target = $region13
    $region12: #{tpu_custom_call.1} parent=1 // pred_region
      %s40 = ssub.s32 256, 256
      %41 = vsyncadd [#allocation7], %s40
      %s42 = sshll.u32 [#allocation8], 4
      %s43 = int_to_ptr.vmem [resolvable:$true] %s42
      %48 = dma.hbm_to_vmem [thread:$0]  %s2, 256, %s43, [#allocation7], 128, 128, 8
    $region13: #{tpu_custom_call.1} parent=1 // pred_fallthru
      _
    // Predicated region
    $region14: #{tpu_custom_call.1} parent=1 // pred_check
      _
    $region15: #{tpu_custom_call.1} parent=1 // pred_check_branch
      %50 = sbr.rel (0) target = $region17
    $region16: #{tpu_custom_call.1} parent=1 // pred_region
      %s52 = ssub.s32 256, 256
      %53 = vsyncadd [#allocation10], %s52
      %s54 = sshll.u32 [#allocation9], 4
      %s55 = int_to_ptr.vmem [resolvable:$true] %s54
      %60 = dma.hbm_to_vmem [thread:$0]  %s3, 256, %s55, [#allocation10], 128, 128, 8
    $region17: #{tpu_custom_call.1} parent=1 // pred_fallthru
      _
    // Predicated region
    $region18: #{tpu_custom_call.1} parent=1 // pred_check
      _
    $region19: #{tpu_custom_call.1} parent=1 // pred_check_branch
      %62 = sbr.rel (0) target = $region21
    $region20: #{tpu_custom_call.1} parent=1 // pred_region
      %63 = dma.done [#allocation4], 256
    $region21: #{tpu_custom_call.1} parent=1 // pred_fallthru
      _
    // Predicated region
    $region22: #{tpu_custom_call.1} parent=1 // pred_check
      _
    $region23: #{tpu_custom_call.1} parent=1 // pred_check_branch
      %65 = sbr.rel (0) target = $region25
    $region24: #{tpu_custom_call.1} parent=1 // pred_region
      %66 = dma.done [#allocation7], 2048
    $region25: #{tpu_custom_call.1} parent=1 // pred_fallthru
      _
    // Predicated region
    $region26: #{tpu_custom_call.1} parent=1 // pred_check
      _
    $region27: #{tpu_custom_call.1} parent=1 // pred_check_branch
      %68 = sbr.rel (0) target = $region29
    $region28: #{tpu_custom_call.1} parent=1 // pred_region
      %69 = dma.done [#allocation7], 256
    $region29: #{tpu_custom_call.1} parent=1 // pred_fallthru
      _
    // Predicated region
    $region30: #{tpu_custom_call.1} parent=1 // pred_check
      _
    $region31: #{tpu_custom_call.1} parent=1 // pred_check_branch
      %71 = sbr.rel (0) target = $region33
    $region32: #{tpu_custom_call.1} parent=1 // pred_region
      %72 = dma.done [#allocation10], 256
    $region33: #{tpu_custom_call.1} parent=1 // pred_fallthru
      _
    %v73 = vld [vmem:[#allocation3] sm:$0xff]
    %v74 = vld [vmem:[#allocation3 + $0x8] sm:$0xff]
    %v75 = vld [vmem:[#allocation6] sm:$0xff]
    %v76 = vld [vmem:[#allocation6 + $0x8] sm:$0xff]
    %v77 = vld [vmem:[#allocation6 + $0x10] sm:$0xff]
    %v78 = vld [vmem:[#allocation6 + $0x18] sm:$0xff]
    %v79 = vld [vmem:[#allocation6 + $0x20] sm:$0xff]
    %v80 = vld [vmem:[#allocation6 + $0x28] sm:$0xff]
    %v81 = vld [vmem:[#allocation6 + $0x30] sm:$0xff]
    %v82 = vld [vmem:[#allocation6 + $0x38] sm:$0xff]
    %v83 = vld [vmem:[#allocation6 + $0x40] sm:$0xff]
    %v84 = vld [vmem:[#allocation6 + $0x48] sm:$0xff]
    %v85 = vld [vmem:[#allocation6 + $0x50] sm:$0xff]
    %v86 = vld [vmem:[#allocation6 + $0x58] sm:$0xff]
    %v87 = vld [vmem:[#allocation6 + $0x60] sm:$0xff]
    %v88 = vld [vmem:[#allocation6 + $0x68] sm:$0xff]
    %v89 = vld [vmem:[#allocation6 + $0x70] sm:$0xff]
    %v90 = vld [vmem:[#allocation6 + $0x78] sm:$0xff]
    %v91 = vld [vmem:[#allocation8] sm:$0xff]
    %v92 = vld [vmem:[#allocation8 + $0x8] sm:$0xff]
    %v93 = vld [vmem:[#allocation9] sm:$0xff]
    %v94 = vld [vmem:[#allocation9 + $0x8] sm:$0xff]
    %95 = vst [vmem:[#allocation2] sm:$0xff] %v91
    %96 = vst [vmem:[#allocation2 + $0x8] sm:$0xff] %v92
    %s97 = scalar_lea.vmem [#allocation2], 16
    %98 = vst [vmem:[%s97] sm:$0xff] %v93
    %99 = vst [vmem:[%s97 + $0x8] sm:$0xff] %v94
    %v100 = vmul.f32 %v91, %v91
    %v101 = vmul.f32 %v92, %v92
    %s102 = scalar_lea.vmem [#allocation2], 32
    %103 = vst [vmem:[%s102] sm:$0xff] %v100
    %104 = vst [vmem:[%s102 + $0x8] sm:$0xff] %v101
    %v105 = vmul.f32 %v93, %v93
    %v106 = vmul.f32 %v94, %v94
    %s107 = scalar_lea.vmem [#allocation2], 48
    %108 = vst [vmem:[%s107] sm:$0xff] %v105
    %109 = vst [vmem:[%s107 + $0x8] sm:$0xff] %v106
    %v110 = vmul.f32 %v91, %v93
    %v111 = vmul.f32 %v92, %v94
    %s112 = scalar_lea.vmem [#allocation2], 64
    %113 = vst [vmem:[%s112] sm:$0xff] %v110
    %114 = vst [vmem:[%s112 + $0x8] sm:$0xff] %v111
    %v115 = vld [vmem:[#allocation2] sm:$0xff]
    %v116 = vld [vmem:[#allocation2 + $0x8] sm:$0xff]
    %v117 = vld [vmem:[#allocation2 + $0x10] sm:$0xff]
    %v118 = vld [vmem:[#allocation2 + $0x18] sm:$0xff]
    %v119 = vld [vmem:[#allocation2 + $0x20] sm:$0xff]
    %v120 = vld [vmem:[#allocation2 + $0x28] sm:$0xff]
    %v121 = vld [vmem:[#allocation2 + $0x30] sm:$0xff]
    %v122 = vld [vmem:[#allocation2 + $0x38] sm:$0xff]
    %v123 = vld [vmem:[#allocation2 + $0x40] sm:$0xff]
    %v124 = vld [vmem:[#allocation2 + $0x48] sm:$0xff]
    %125 = vmatprep.subr.mxu0 0.0
    %126 = vmatpush1.msra.mxu0 %v90
    %127 = vmatprep.subr.mxu0 0.0
    %128 = vmatpush1.msra.mxu0 %v89
    %129 = vmatprep.subr.mxu0 0.0
    %130 = vmatpush1.msra.mxu0 %v88
    %131 = vmatprep.subr.mxu0 0.0
    %132 = vmatpush1.msra.mxu0 %v87
    %133 = vmatprep.subr.mxu0 0.0
    %134 = vmatpush1.msra.mxu0 %v86
    %135 = vmatprep.subr.mxu0 0.0
    %136 = vmatpush1.msra.mxu0 %v85
    %137 = vmatprep.subr.mxu0 0.0
    %138 = vmatpush1.msra.mxu0 %v84
    %139 = vmatprep.subr.mxu0 0.0
    %140 = vmatpush1.msra.mxu0 %v83
    %141 = vmatprep.subr.mxu0 0.0
    %142 = vmatpush1.msra.mxu0 %v82
    %143 = vmatprep.subr.mxu0 0.0
    %144 = vmatpush1.msra.mxu0 %v81
    %145 = vmatprep.subr.mxu0 0.0
    %146 = vmatpush1.msra.mxu0 %v80
    %147 = vmatprep.subr.mxu0 0.0
    %148 = vmatpush1.msra.mxu0 %v79
    %149 = vmatprep.subr.mxu0 0.0
    %150 = vmatpush1.msra.mxu0 %v78
    %151 = vmatprep.subr.mxu0 0.0
    %152 = vmatpush1.msra.mxu0 %v77
    %153 = vmatprep.subr.mxu0 0.0
    %154 = vmatpush1.msra.mxu0 %v76
    %155 = vmatprep.subr.mxu0 0.0
    %156 = vmatpush1.msra.mxu0 %v75
    %157 = vmatprep.subr.mxu0 0.0
    %158 = vmatpush2.msra.mxu0 0.0
    %159 = vmatprep.subr.mxu0 0.0
    %160 = vmatpush2.msra.mxu0 0.0
    %161 = vmatprep.subr.mxu0 0.0
    %162 = vmatpush2.msra.mxu0 0.0
    %163 = vmatprep.subr.mxu0 0.0
    %164 = vmatpush2.msra.mxu0 0.0
    %165 = vmatprep.subr.mxu0 0.0
    %166 = vmatpush2.msra.mxu0 0.0
    %167 = vmatprep.subr.mxu0 0.0
    %168 = vmatpush2.msra.mxu0 0.0
    %169 = vmatprep.subr.mxu0 0.0
    %170 = vmatpush2.msra.mxu0 0.0
    %171 = vmatprep.subr.mxu0 0.0
    %172 = vmatpush2.msra.mxu0 0.0
    %173 = vmatprep.subr.mxu0 0.0
    %174 = vmatpush2.msra.mxu0 0.0
    %175 = vmatprep.subr.mxu0 0.0
    %176 = vmatpush2.msra.mxu0 0.0
    %177 = vmatprep.subr.mxu0 0.0
    %178 = vmatpush2.msra.mxu0 0.0
    %179 = vmatprep.subr.mxu0 0.0
    %180 = vmatpush2.msra.mxu0 0.0
    %181 = vmatprep.subr.mxu0 0.0
    %182 = vmatpush2.msra.mxu0 0.0
    %183 = vmatprep.subr.mxu0 0.0
    %184 = vmatpush2.msra.mxu0 0.0
    %185 = vmatprep.subr.mxu0 0.0
    %186 = vmatpush2.msra.mxu0 0.0
    %187 = vmatprep.subr.mxu0 0.0
    %188 = vmatpush2.msra.mxu0 0.0
    %189 = vmatprep.mubr.f32.mxu0 0.0
    %190 = vmatmul.mubr.f32.gmra.mxu0 %v115
    %v191 = vpop.f32.mrf.mxu0
    %v192 = vadd.f32 0.0, %v191
    %v193 = vpop.f32.mrf.mxu0
    %194 = vmatprep.mubr.f32.mxu0 0.0
    %195 = vmatmul.mubr.f32.gmra.mxu0 %v116
    %v196 = vpop.f32.mrf.mxu0
    %v197 = vadd.f32 0.0, %v196
    %v198 = vpop.f32.mrf.mxu0
    %199 = vmatprep.mubr.f32.mxu0 0.0
    %200 = vmatmul.mubr.f32.gmra.mxu0 %v117
    %v201 = vpop.f32.mrf.mxu0
    %v202 = vadd.f32 0.0, %v201
    %v203 = vpop.f32.mrf.mxu0
    %204 = vmatprep.mubr.f32.mxu0 0.0
    %205 = vmatmul.mubr.f32.gmra.mxu0 %v118
    %v206 = vpop.f32.mrf.mxu0
    %v207 = vadd.f32 0.0, %v206
    %v208 = vpop.f32.mrf.mxu0
    %209 = vmatprep.mubr.f32.mxu0 0.0
    %210 = vmatmul.mubr.f32.gmra.mxu0 %v119
    %v211 = vpop.f32.mrf.mxu0
    %v212 = vadd.f32 0.0, %v211
    %v213 = vpop.f32.mrf.mxu0
    %214 = vmatprep.mubr.f32.mxu0 0.0
    %215 = vmatmul.mubr.f32.gmra.mxu0 %v120
    %v216 = vpop.f32.mrf.mxu0
    %v217 = vadd.f32 0.0, %v216
    %v218 = vpop.f32.mrf.mxu0
    %219 = vmatprep.mubr.f32.mxu0 0.0
    %220 = vmatmul.mubr.f32.gmra.mxu0 %v121
    %v221 = vpop.f32.mrf.mxu0
    %v222 = vadd.f32 0.0, %v221
    %v223 = vpop.f32.mrf.mxu0
    %224 = vmatprep.mubr.f32.mxu0 0.0
    %225 = vmatmul.mubr.f32.gmra.mxu0 %v122
    %v226 = vpop.f32.mrf.mxu0
    %v227 = vadd.f32 0.0, %v226
    %v228 = vpop.f32.mrf.mxu0
    %229 = vmatprep.mubr.f32.mxu0 0.0
    %230 = vmatmul.mubr.f32.gmra.mxu0 %v123
    %v231 = vpop.f32.mrf.mxu0
    %v232 = vadd.f32 0.0, %v231
    %v233 = vpop.f32.mrf.mxu0
    %234 = vmatprep.mubr.f32.mxu0 0.0
    %235 = vmatmul.mubr.f32.gmra.mxu0 %v124
    %v236 = vpop.f32.mrf.mxu0
    %v237 = vadd.f32 0.0, %v236
    %v238 = vpop.f32.mrf.mxu0
    %239 = vdwg.mxu0
    %240 = vxpose.xlu0.b32.start [1/16] %v192, 128
    %241 = vxpose.xlu0.b32.cont [2/16] %v197, 128
    %242 = vxpose.xlu0.b32.cont [3/16] 0.0, 128
    %243 = vxpose.xlu0.b32.cont [4/16] 0.0, 128
    %244 = vxpose.xlu0.b32.cont [5/16] 0.0, 128
    %245 = vxpose.xlu0.b32.cont [6/16] 0.0, 128
    %246 = vxpose.xlu0.b32.cont [7/16] 0.0, 128
    %247 = vxpose.xlu0.b32.cont [8/16] 0.0, 128
    %248 = vxpose.xlu0.b32.cont [9/16] 0.0, 128
    %249 = vxpose.xlu0.b32.cont [10/16] 0.0, 128
    %250 = vxpose.xlu0.b32.cont [11/16] 0.0, 128
    %251 = vxpose.xlu0.b32.cont [12/16] 0.0, 128
    %252 = vxpose.xlu0.b32.cont [13/16] 0.0, 128
    %253 = vxpose.xlu0.b32.cont [14/16] 0.0, 128
    %254 = vxpose.xlu0.b32.cont [15/16] 0.0, 128
    %255 = vxpose.xlu0.b32.end [16/16] 0.0, 128
    %v256 = vpop.trf.xlu0
    %v257 = vpop.trf.xlu0
    %v258 = vpop.trf.xlu0
    %v259 = vpop.trf.xlu0
    %v260 = vpop.trf.xlu0
    %v261 = vpop.trf.xlu0
    %v262 = vpop.trf.xlu0
    %v263 = vpop.trf.xlu0
    %v264 = vpop.trf.xlu0
    %v265 = vpop.trf.xlu0
    %v266 = vpop.trf.xlu0
    %v267 = vpop.trf.xlu0
    %v268 = vpop.trf.xlu0
    %v269 = vpop.trf.xlu0
    %v270 = vpop.trf.xlu0
    %v271 = vpop.trf.xlu0
    %272 = vxpose.xlu0.b32.start [1/16] %v202, 128
    %273 = vxpose.xlu0.b32.cont [2/16] %v207, 128
    %274 = vxpose.xlu0.b32.cont [3/16] 0.0, 128
    %275 = vxpose.xlu0.b32.cont [4/16] 0.0, 128
    %276 = vxpose.xlu0.b32.cont [5/16] 0.0, 128
    %277 = vxpose.xlu0.b32.cont [6/16] 0.0, 128
    %278 = vxpose.xlu0.b32.cont [7/16] 0.0, 128
    %279 = vxpose.xlu0.b32.cont [8/16] 0.0, 128
    %280 = vxpose.xlu0.b32.cont [9/16] 0.0, 128
    %281 = vxpose.xlu0.b32.cont [10/16] 0.0, 128
    %282 = vxpose.xlu0.b32.cont [11/16] 0.0, 128
    %283 = vxpose.xlu0.b32.cont [12/16] 0.0, 128
    %284 = vxpose.xlu0.b32.cont [13/16] 0.0, 128
    %285 = vxpose.xlu0.b32.cont [14/16] 0.0, 128
    %286 = vxpose.xlu0.b32.cont [15/16] 0.0, 128
    %287 = vxpose.xlu0.b32.end [16/16] 0.0, 128
    %v288 = vpop.trf.xlu0
    %v289 = vpop.trf.xlu0
    %v290 = vpop.trf.xlu0
    %v291 = vpop.trf.xlu0
    %v292 = vpop.trf.xlu0
    %v293 = vpop.trf.xlu0
    %v294 = vpop.trf.xlu0
    %v295 = vpop.trf.xlu0
    %v296 = vpop.trf.xlu0
    %v297 = vpop.trf.xlu0
    %v298 = vpop.trf.xlu0
    %v299 = vpop.trf.xlu0
    %v300 = vpop.trf.xlu0
    %v301 = vpop.trf.xlu0
    %v302 = vpop.trf.xlu0
    %v303 = vpop.trf.xlu0
    %304 = vxpose.xlu0.b32.start [1/16] %v212, 128
    %305 = vxpose.xlu0.b32.cont [2/16] %v217, 128
    %306 = vxpose.xlu0.b32.cont [3/16] 0.0, 128
    %307 = vxpose.xlu0.b32.cont [4/16] 0.0, 128
    %308 = vxpose.xlu0.b32.cont [5/16] 0.0, 128
    %309 = vxpose.xlu0.b32.cont [6/16] 0.0, 128
    %310 = vxpose.xlu0.b32.cont [7/16] 0.0, 128
    %311 = vxpose.xlu0.b32.cont [8/16] 0.0, 128
    %312 = vxpose.xlu0.b32.cont [9/16] 0.0, 128
    %313 = vxpose.xlu0.b32.cont [10/16] 0.0, 128
    %314 = vxpose.xlu0.b32.cont [11/16] 0.0, 128
    %315 = vxpose.xlu0.b32.cont [12/16] 0.0, 128
    %316 = vxpose.xlu0.b32.cont [13/16] 0.0, 128
    %317 = vxpose.xlu0.b32.cont [14/16] 0.0, 128
    %318 = vxpose.xlu0.b32.cont [15/16] 0.0, 128
    %319 = vxpose.xlu0.b32.end [16/16] 0.0, 128
    %v320 = vpop.trf.xlu0
    %v321 = vpop.trf.xlu0
    %v322 = vpop.trf.xlu0
    %v323 = vpop.trf.xlu0
    %v324 = vpop.trf.xlu0
    %v325 = vpop.trf.xlu0
    %v326 = vpop.trf.xlu0
    %v327 = vpop.trf.xlu0
    %v328 = vpop.trf.xlu0
    %v329 = vpop.trf.xlu0
    %v330 = vpop.trf.xlu0
    %v331 = vpop.trf.xlu0
    %v332 = vpop.trf.xlu0
    %v333 = vpop.trf.xlu0
    %v334 = vpop.trf.xlu0
    %v335 = vpop.trf.xlu0
    %336 = vxpose.xlu0.b32.start [1/16] %v222, 128
    %337 = vxpose.xlu0.b32.cont [2/16] %v227, 128
    %338 = vxpose.xlu0.b32.cont [3/16] 0.0, 128
    %339 = vxpose.xlu0.b32.cont [4/16] 0.0, 128
    %340 = vxpose.xlu0.b32.cont [5/16] 0.0, 128
    %341 = vxpose.xlu0.b32.cont [6/16] 0.0, 128
    %342 = vxpose.xlu0.b32.cont [7/16] 0.0, 128
    %343 = vxpose.xlu0.b32.cont [8/16] 0.0, 128
    %344 = vxpose.xlu0.b32.cont [9/16] 0.0, 128
    %345 = vxpose.xlu0.b32.cont [10/16] 0.0, 128
    %346 = vxpose.xlu0.b32.cont [11/16] 0.0, 128
    %347 = vxpose.xlu0.b32.cont [12/16] 0.0, 128
    %348 = vxpose.xlu0.b32.cont [13/16] 0.0, 128
    %349 = vxpose.xlu0.b32.cont [14/16] 0.0, 128
    %350 = vxpose.xlu0.b32.cont [15/16] 0.0, 128
    %351 = vxpose.xlu0.b32.end [16/16] 0.0, 128
    %v352 = vpop.trf.xlu0
    %v353 = vpop.trf.xlu0
    %v354 = vpop.trf.xlu0
    %v355 = vpop.trf.xlu0
    %v356 = vpop.trf.xlu0
    %v357 = vpop.trf.xlu0
    %v358 = vpop.trf.xlu0
    %v359 = vpop.trf.xlu0
    %v360 = vpop.trf.xlu0
    %v361 = vpop.trf.xlu0
    %v362 = vpop.trf.xlu0
    %v363 = vpop.trf.xlu0
    %v364 = vpop.trf.xlu0
    %v365 = vpop.trf.xlu0
    %v366 = vpop.trf.xlu0
    %v367 = vpop.trf.xlu0
    %368 = vxpose.xlu0.b32.start [1/16] %v232, 128
    %369 = vxpose.xlu0.b32.cont [2/16] %v237, 128
    %370 = vxpose.xlu0.b32.cont [3/16] 0.0, 128
    %371 = vxpose.xlu0.b32.cont [4/16] 0.0, 128
    %372 = vxpose.xlu0.b32.cont [5/16] 0.0, 128
    %373 = vxpose.xlu0.b32.cont [6/16] 0.0, 128
    %374 = vxpose.xlu0.b32.cont [7/16] 0.0, 128
    %375 = vxpose.xlu0.b32.cont [8/16] 0.0, 128
    %376 = vxpose.xlu0.b32.cont [9/16] 0.0, 128
    %377 = vxpose.xlu0.b32.cont [10/16] 0.0, 128
    %378 = vxpose.xlu0.b32.cont [11/16] 0.0, 128
    %379 = vxpose.xlu0.b32.cont [12/16] 0.0, 128
    %380 = vxpose.xlu0.b32.cont [13/16] 0.0, 128
    %381 = vxpose.xlu0.b32.cont [14/16] 0.0, 128
    %382 = vxpose.xlu0.b32.cont [15/16] 0.0, 128
    %383 = vxpose.xlu0.b32.end [16/16] 0.0, 128
    %v384 = vpop.trf.xlu0
    %v385 = vpop.trf.xlu0
    %v386 = vpop.trf.xlu0
    %v387 = vpop.trf.xlu0
    %v388 = vpop.trf.xlu0
    %v389 = vpop.trf.xlu0
    %v390 = vpop.trf.xlu0
    %v391 = vpop.trf.xlu0
    %v392 = vpop.trf.xlu0
    %v393 = vpop.trf.xlu0
    %v394 = vpop.trf.xlu0
    %v395 = vpop.trf.xlu0
    %v396 = vpop.trf.xlu0
    %v397 = vpop.trf.xlu0
    %v398 = vpop.trf.xlu0
    %v399 = vpop.trf.xlu0
    %vm400 = vcmask 130048
    %v402 = vsel %vm400, %v256, 0
    %v405 = vsel %vm400, %v257, 0
    %v408 = vsel %vm400, %v258, 0
    %v411 = vsel %vm400, %v259, 0
    %v414 = vsel %vm400, %v260, 0
    %v417 = vsel %vm400, %v261, 0
    %v420 = vsel %vm400, %v262, 0
    %v423 = vsel %vm400, %v263, 0
    %v426 = vsel %vm400, %v264, 0
    %v429 = vsel %vm400, %v265, 0
    %v432 = vsel %vm400, %v266, 0
    %v435 = vsel %vm400, %v267, 0
    %v438 = vsel %vm400, %v268, 0
    %v441 = vsel %vm400, %v269, 0
    %v444 = vsel %vm400, %v270, 0
    %v447 = vsel %vm400, %v271, 0
    %v450 = vsel %vm400, %v288, 0
    %v453 = vsel %vm400, %v289, 0
    %v456 = vsel %vm400, %v290, 0
    %v459 = vsel %vm400, %v291, 0
    %v462 = vsel %vm400, %v292, 0
    %v465 = vsel %vm400, %v293, 0
    %v468 = vsel %vm400, %v294, 0
    %v471 = vsel %vm400, %v295, 0
    %v474 = vsel %vm400, %v296, 0
    %v477 = vsel %vm400, %v297, 0
    %v480 = vsel %vm400, %v298, 0
    %v483 = vsel %vm400, %v299, 0
    %v486 = vsel %vm400, %v300, 0
    %v489 = vsel %vm400, %v301, 0
    %v492 = vsel %vm400, %v302, 0
    %v495 = vsel %vm400, %v303, 0
    %v498 = vsel %vm400, %v320, 0
    %v501 = vsel %vm400, %v321, 0
    %v504 = vsel %vm400, %v322, 0
    %v507 = vsel %vm400, %v323, 0
    %v510 = vsel %vm400, %v324, 0
    %v513 = vsel %vm400, %v325, 0
    %v516 = vsel %vm400, %v326, 0
    %v519 = vsel %vm400, %v327, 0
    %v522 = vsel %vm400, %v328, 0
    %v525 = vsel %vm400, %v329, 0
    %v528 = vsel %vm400, %v330, 0
    %v531 = vsel %vm400, %v331, 0
    %v534 = vsel %vm400, %v332, 0
    %v537 = vsel %vm400, %v333, 0
    %v540 = vsel %vm400, %v334, 0
    %v543 = vsel %vm400, %v335, 0
    %v546 = vsel %vm400, %v352, 0
    %v549 = vsel %vm400, %v353, 0
    %v552 = vsel %vm400, %v354, 0
    %v555 = vsel %vm400, %v355, 0
    %v558 = vsel %vm400, %v356, 0
    %v561 = vsel %vm400, %v357, 0
    %v564 = vsel %vm400, %v358, 0
    %v567 = vsel %vm400, %v359, 0
    %v570 = vsel %vm400, %v360, 0
    %v573 = vsel %vm400, %v361, 0
    %v576 = vsel %vm400, %v362, 0
    %v579 = vsel %vm400, %v363, 0
    %v582 = vsel %vm400, %v364, 0
    %v585 = vsel %vm400, %v365, 0
    %v588 = vsel %vm400, %v366, 0
    %v591 = vsel %vm400, %v367, 0
    %v594 = vsel %vm400, %v384, 0
    %v597 = vsel %vm400, %v385, 0
    %v600 = vsel %vm400, %v386, 0
    %v603 = vsel %vm400, %v387, 0
    %v606 = vsel %vm400, %v388, 0
    %v609 = vsel %vm400, %v389, 0
    %v612 = vsel %vm400, %v390, 0
    %v615 = vsel %vm400, %v391, 0
    %v618 = vsel %vm400, %v392, 0
    %v621 = vsel %vm400, %v393, 0
    %v624 = vsel %vm400, %v394, 0
    %v627 = vsel %vm400, %v395, 0
    %v630 = vsel %vm400, %v396, 0
    %v633 = vsel %vm400, %v397, 0
    %v636 = vsel %vm400, %v398, 0
    %v639 = vsel %vm400, %v399, 0
    %641 = vmatprep.subr.mxu0 0.0
    %642 = vmatpush1.msra.mxu0 0.0
    %643 = vmatprep.subr.mxu0 0.0
    %644 = vmatpush1.msra.mxu0 0.0
    %645 = vmatprep.subr.mxu0 0.0
    %646 = vmatpush1.msra.mxu0 0.0
    %647 = vmatprep.subr.mxu0 0.0
    %648 = vmatpush1.msra.mxu0 0.0
    %649 = vmatprep.subr.mxu0 0.0
    %650 = vmatpush1.msra.mxu0 0.0
    %651 = vmatprep.subr.mxu0 0.0
    %652 = vmatpush1.msra.mxu0 0.0
    %653 = vmatprep.subr.mxu0 0.0
    %654 = vmatpush1.msra.mxu0 0.0
    %655 = vmatprep.subr.mxu0 0.0
    %656 = vmatpush1.msra.mxu0 0.0
    %657 = vmatprep.subr.mxu0 0.0
    %658 = vmatpush1.msra.mxu0 0.0
    %659 = vmatprep.subr.mxu0 0.0
    %660 = vmatpush1.msra.mxu0 0.0
    %661 = vmatprep.subr.mxu0 0.0
    %662 = vmatpush1.msra.mxu0 0.0
    %663 = vmatprep.subr.mxu0 0.0
    %664 = vmatpush1.msra.mxu0 0.0
    %665 = vmatprep.subr.mxu0 0.0
    %666 = vmatpush1.msra.mxu0 0.0
    %667 = vmatprep.subr.mxu0 0.0
    %668 = vmatpush1.msra.mxu0 0.0
    %669 = vmatprep.subr.mxu0 0.0
    %670 = vmatpush1.msra.mxu0 %v74
    %671 = vmatprep.subr.mxu0 0.0
    %672 = vmatpush1.msra.mxu0 %v73
    %673 = vmatprep.subr.mxu0 0.0
    %674 = vmatpush2.msra.mxu0 0.0
    %675 = vmatprep.subr.mxu0 0.0
    %676 = vmatpush2.msra.mxu0 0.0
    %677 = vmatprep.subr.mxu0 0.0
    %678 = vmatpush2.msra.mxu0 0.0
    %679 = vmatprep.subr.mxu0 0.0
    %680 = vmatpush2.msra.mxu0 0.0
    %681 = vmatprep.subr.mxu0 0.0
    %682 = vmatpush2.msra.mxu0 0.0
    %683 = vmatprep.subr.mxu0 0.0
    %684 = vmatpush2.msra.mxu0 0.0
    %685 = vmatprep.subr.mxu0 0.0
    %686 = vmatpush2.msra.mxu0 0.0
    %687 = vmatprep.subr.mxu0 0.0
    %688 = vmatpush2.msra.mxu0 0.0
    %689 = vmatprep.subr.mxu0 0.0
    %690 = vmatpush2.msra.mxu0 0.0
    %691 = vmatprep.subr.mxu0 0.0
    %692 = vmatpush2.msra.mxu0 0.0
    %693 = vmatprep.subr.mxu0 0.0
    %694 = vmatpush2.msra.mxu0 0.0
    %695 = vmatprep.subr.mxu0 0.0
    %696 = vmatpush2.msra.mxu0 0.0
    %697 = vmatprep.subr.mxu0 0.0
    %698 = vmatpush2.msra.mxu0 0.0
    %699 = vmatprep.subr.mxu0 0.0
    %700 = vmatpush2.msra.mxu0 0.0
    %701 = vmatprep.subr.mxu0 0.0
    %702 = vmatpush2.msra.mxu0 0.0
    %703 = vmatprep.subr.mxu0 0.0
    %704 = vmatpush2.msra.mxu0 0.0
    %705 = vmatprep.mubr.f32.mxu0 0.0
    %706 = vmatmul.mubr.f32.gmra.mxu0 %v402
    %v707 = vpop.f32.mrf.mxu0
    %v708 = vadd.f32 0.0, %v707
    %v709 = vpop.f32.mrf.mxu0
    %710 = vmatprep.mubr.f32.mxu0 0.0
    %711 = vmatmul.mubr.f32.gmra.mxu0 %v405
    %v712 = vpop.f32.mrf.mxu0
    %v713 = vadd.f32 0.0, %v712
    %v714 = vpop.f32.mrf.mxu0
    %715 = vmatprep.mubr.f32.mxu0 0.0
    %716 = vmatmul.mubr.f32.gmra.mxu0 %v408
    %v717 = vpop.f32.mrf.mxu0
    %v718 = vadd.f32 0.0, %v717
    %v719 = vpop.f32.mrf.mxu0
    %720 = vmatprep.mubr.f32.mxu0 0.0
    %721 = vmatmul.mubr.f32.gmra.mxu0 %v411
    %v722 = vpop.f32.mrf.mxu0
    %v723 = vadd.f32 0.0, %v722
    %v724 = vpop.f32.mrf.mxu0
    %725 = vmatprep.mubr.f32.mxu0 0.0
    %726 = vmatmul.mubr.f32.gmra.mxu0 %v414
    %v727 = vpop.f32.mrf.mxu0
    %v728 = vadd.f32 0.0, %v727
    %v729 = vpop.f32.mrf.mxu0
    %730 = vmatprep.mubr.f32.mxu0 0.0
    %731 = vmatmul.mubr.f32.gmra.mxu0 %v417
    %v732 = vpop.f32.mrf.mxu0
    %v733 = vadd.f32 0.0, %v732
    %v734 = vpop.f32.mrf.mxu0
    %735 = vmatprep.mubr.f32.mxu0 0.0
    %736 = vmatmul.mubr.f32.gmra.mxu0 %v420
    %v737 = vpop.f32.mrf.mxu0
    %v738 = vadd.f32 0.0, %v737
    %v739 = vpop.f32.mrf.mxu0
    %740 = vmatprep.mubr.f32.mxu0 0.0
    %741 = vmatmul.mubr.f32.gmra.mxu0 %v423
    %v742 = vpop.f32.mrf.mxu0
    %v743 = vadd.f32 0.0, %v742
    %v744 = vpop.f32.mrf.mxu0
    %745 = vmatprep.mubr.f32.mxu0 0.0
    %746 = vmatmul.mubr.f32.gmra.mxu0 %v426
    %v747 = vpop.f32.mrf.mxu0
    %v748 = vadd.f32 0.0, %v747
    %v749 = vpop.f32.mrf.mxu0
    %750 = vmatprep.mubr.f32.mxu0 0.0
    %751 = vmatmul.mubr.f32.gmra.mxu0 %v429
    %v752 = vpop.f32.mrf.mxu0
    %v753 = vadd.f32 0.0, %v752
    %v754 = vpop.f32.mrf.mxu0
    %755 = vmatprep.mubr.f32.mxu0 0.0
    %756 = vmatmul.mubr.f32.gmra.mxu0 %v432
    %v757 = vpop.f32.mrf.mxu0
    %v758 = vadd.f32 0.0, %v757
    %v759 = vpop.f32.mrf.mxu0
    %760 = vmatprep.mubr.f32.mxu0 0.0
    %761 = vmatmul.mubr.f32.gmra.mxu0 %v435
    %v762 = vpop.f32.mrf.mxu0
    %v763 = vadd.f32 0.0, %v762
    %v764 = vpop.f32.mrf.mxu0
    %765 = vmatprep.mubr.f32.mxu0 0.0
    %766 = vmatmul.mubr.f32.gmra.mxu0 %v438
    %v767 = vpop.f32.mrf.mxu0
    %v768 = vadd.f32 0.0, %v767
    %v769 = vpop.f32.mrf.mxu0
    %770 = vmatprep.mubr.f32.mxu0 0.0
    %771 = vmatmul.mubr.f32.gmra.mxu0 %v441
    %v772 = vpop.f32.mrf.mxu0
    %v773 = vadd.f32 0.0, %v772
    %v774 = vpop.f32.mrf.mxu0
    %775 = vmatprep.mubr.f32.mxu0 0.0
    %776 = vmatmul.mubr.f32.gmra.mxu0 %v444
    %v777 = vpop.f32.mrf.mxu0
    %v778 = vadd.f32 0.0, %v777
    %v779 = vpop.f32.mrf.mxu0
    %780 = vmatprep.mubr.f32.mxu0 0.0
    %781 = vmatmul.mubr.f32.gmra.mxu0 %v447
    %v782 = vpop.f32.mrf.mxu0
    %v783 = vadd.f32 0.0, %v782
    %v784 = vpop.f32.mrf.mxu0
    %785 = vmatprep.mubr.f32.mxu0 0.0
    %786 = vmatmul.mubr.f32.gmra.mxu0 %v450
    %v787 = vpop.f32.mrf.mxu0
    %v788 = vadd.f32 0.0, %v787
    %v789 = vpop.f32.mrf.mxu0
    %790 = vmatprep.mubr.f32.mxu0 0.0
    %791 = vmatmul.mubr.f32.gmra.mxu0 %v453
    %v792 = vpop.f32.mrf.mxu0
    %v793 = vadd.f32 0.0, %v792
    %v794 = vpop.f32.mrf.mxu0
    %795 = vmatprep.mubr.f32.mxu0 0.0
    %796 = vmatmul.mubr.f32.gmra.mxu0 %v456
    %v797 = vpop.f32.mrf.mxu0
    %v798 = vadd.f32 0.0, %v797
    %v799 = vpop.f32.mrf.mxu0
    %800 = vmatprep.mubr.f32.mxu0 0.0
    %801 = vmatmul.mubr.f32.gmra.mxu0 %v459
    %v802 = vpop.f32.mrf.mxu0
    %v803 = vadd.f32 0.0, %v802
    %v804 = vpop.f32.mrf.mxu0
    %805 = vmatprep.mubr.f32.mxu0 0.0
    %806 = vmatmul.mubr.f32.gmra.mxu0 %v462
    %v807 = vpop.f32.mrf.mxu0
    %v808 = vadd.f32 0.0, %v807
    %v809 = vpop.f32.mrf.mxu0
    %810 = vmatprep.mubr.f32.mxu0 0.0
    %811 = vmatmul.mubr.f32.gmra.mxu0 %v465
    %v812 = vpop.f32.mrf.mxu0
    %v813 = vadd.f32 0.0, %v812
    %v814 = vpop.f32.mrf.mxu0
    %815 = vmatprep.mubr.f32.mxu0 0.0
    %816 = vmatmul.mubr.f32.gmra.mxu0 %v468
    %v817 = vpop.f32.mrf.mxu0
    %v818 = vadd.f32 0.0, %v817
    %v819 = vpop.f32.mrf.mxu0
    %820 = vmatprep.mubr.f32.mxu0 0.0
    %821 = vmatmul.mubr.f32.gmra.mxu0 %v471
    %v822 = vpop.f32.mrf.mxu0
    %v823 = vadd.f32 0.0, %v822
    %v824 = vpop.f32.mrf.mxu0
    %825 = vmatprep.mubr.f32.mxu0 0.0
    %826 = vmatmul.mubr.f32.gmra.mxu0 %v474
    %v827 = vpop.f32.mrf.mxu0
    %v828 = vadd.f32 0.0, %v827
    %v829 = vpop.f32.mrf.mxu0
    %830 = vmatprep.mubr.f32.mxu0 0.0
    %831 = vmatmul.mubr.f32.gmra.mxu0 %v477
    %v832 = vpop.f32.mrf.mxu0
    %v833 = vadd.f32 0.0, %v832
    %v834 = vpop.f32.mrf.mxu0
    %835 = vmatprep.mubr.f32.mxu0 0.0
    %836 = vmatmul.mubr.f32.gmra.mxu0 %v480
    %v837 = vpop.f32.mrf.mxu0
    %v838 = vadd.f32 0.0, %v837
    %v839 = vpop.f32.mrf.mxu0
    %840 = vmatprep.mubr.f32.mxu0 0.0
    %841 = vmatmul.mubr.f32.gmra.mxu0 %v483
    %v842 = vpop.f32.mrf.mxu0
    %v843 = vadd.f32 0.0, %v842
    %v844 = vpop.f32.mrf.mxu0
    %845 = vmatprep.mubr.f32.mxu0 0.0
    %846 = vmatmul.mubr.f32.gmra.mxu0 %v486
    %v847 = vpop.f32.mrf.mxu0
    %v848 = vadd.f32 0.0, %v847
    %v849 = vpop.f32.mrf.mxu0
    %850 = vmatprep.mubr.f32.mxu0 0.0
    %851 = vmatmul.mubr.f32.gmra.mxu0 %v489
    %v852 = vpop.f32.mrf.mxu0
    %v853 = vadd.f32 0.0, %v852
    %v854 = vpop.f32.mrf.mxu0
    %855 = vmatprep.mubr.f32.mxu0 0.0
    %856 = vmatmul.mubr.f32.gmra.mxu0 %v492
    %v857 = vpop.f32.mrf.mxu0
    %v858 = vadd.f32 0.0, %v857
    %v859 = vpop.f32.mrf.mxu0
    %860 = vmatprep.mubr.f32.mxu0 0.0
    %861 = vmatmul.mubr.f32.gmra.mxu0 %v495
    %v862 = vpop.f32.mrf.mxu0
    %v863 = vadd.f32 0.0, %v862
    %v864 = vpop.f32.mrf.mxu0
    %865 = vmatprep.mubr.f32.mxu0 0.0
    %866 = vmatmul.mubr.f32.gmra.mxu0 %v498
    %v867 = vpop.f32.mrf.mxu0
    %v868 = vadd.f32 0.0, %v867
    %v869 = vpop.f32.mrf.mxu0
    %870 = vmatprep.mubr.f32.mxu0 0.0
    %871 = vmatmul.mubr.f32.gmra.mxu0 %v501
    %v872 = vpop.f32.mrf.mxu0
    %v873 = vadd.f32 0.0, %v872
    %v874 = vpop.f32.mrf.mxu0
    %875 = vmatprep.mubr.f32.mxu0 0.0
    %876 = vmatmul.mubr.f32.gmra.mxu0 %v504
    %v877 = vpop.f32.mrf.mxu0
    %v878 = vadd.f32 0.0, %v877
    %v879 = vpop.f32.mrf.mxu0
    %880 = vmatprep.mubr.f32.mxu0 0.0
    %881 = vmatmul.mubr.f32.gmra.mxu0 %v507
    %v882 = vpop.f32.mrf.mxu0
    %v883 = vadd.f32 0.0, %v882
    %v884 = vpop.f32.mrf.mxu0
    %885 = vmatprep.mubr.f32.mxu0 0.0
    %886 = vmatmul.mubr.f32.gmra.mxu0 %v510
    %v887 = vpop.f32.mrf.mxu0
    %v888 = vadd.f32 0.0, %v887
    %v889 = vpop.f32.mrf.mxu0
    %890 = vmatprep.mubr.f32.mxu0 0.0
    %891 = vmatmul.mubr.f32.gmra.mxu0 %v513
    %v892 = vpop.f32.mrf.mxu0
    %v893 = vadd.f32 0.0, %v892
    %v894 = vpop.f32.mrf.mxu0
    %895 = vmatprep.mubr.f32.mxu0 0.0
    %896 = vmatmul.mubr.f32.gmra.mxu0 %v516
    %v897 = vpop.f32.mrf.mxu0
    %v898 = vadd.f32 0.0, %v897
    %v899 = vpop.f32.mrf.mxu0
    %900 = vmatprep.mubr.f32.mxu0 0.0
    %901 = vmatmul.mubr.f32.gmra.mxu0 %v519
    %v902 = vpop.f32.mrf.mxu0
    %v903 = vadd.f32 0.0, %v902
    %v904 = vpop.f32.mrf.mxu0
    %905 = vmatprep.mubr.f32.mxu0 0.0
    %906 = vmatmul.mubr.f32.gmra.mxu0 %v522
    %v907 = vpop.f32.mrf.mxu0
    %v908 = vadd.f32 0.0, %v907
    %v909 = vpop.f32.mrf.mxu0
    %910 = vmatprep.mubr.f32.mxu0 0.0
    %911 = vmatmul.mubr.f32.gmra.mxu0 %v525
    %v912 = vpop.f32.mrf.mxu0
    %v913 = vadd.f32 0.0, %v912
    %v914 = vpop.f32.mrf.mxu0
    %915 = vmatprep.mubr.f32.mxu0 0.0
    %916 = vmatmul.mubr.f32.gmra.mxu0 %v528
    %v917 = vpop.f32.mrf.mxu0
    %v918 = vadd.f32 0.0, %v917
    %v919 = vpop.f32.mrf.mxu0
    %920 = vmatprep.mubr.f32.mxu0 0.0
    %921 = vmatmul.mubr.f32.gmra.mxu0 %v531
    %v922 = vpop.f32.mrf.mxu0
    %v923 = vadd.f32 0.0, %v922
    %v924 = vpop.f32.mrf.mxu0
    %925 = vmatprep.mubr.f32.mxu0 0.0
    %926 = vmatmul.mubr.f32.gmra.mxu0 %v534
    %v927 = vpop.f32.mrf.mxu0
    %v928 = vadd.f32 0.0, %v927
    %v929 = vpop.f32.mrf.mxu0
    %930 = vmatprep.mubr.f32.mxu0 0.0
    %931 = vmatmul.mubr.f32.gmra.mxu0 %v537
    %v932 = vpop.f32.mrf.mxu0
    %v933 = vadd.f32 0.0, %v932
    %v934 = vpop.f32.mrf.mxu0
    %935 = vmatprep.mubr.f32.mxu0 0.0
    %936 = vmatmul.mubr.f32.gmra.mxu0 %v540
    %v937 = vpop.f32.mrf.mxu0
    %v938 = vadd.f32 0.0, %v937
    %v939 = vpop.f32.mrf.mxu0
    %940 = vmatprep.mubr.f32.mxu0 0.0
    %941 = vmatmul.mubr.f32.gmra.mxu0 %v543
    %v942 = vpop.f32.mrf.mxu0
    %v943 = vadd.f32 0.0, %v942
    %v944 = vpop.f32.mrf.mxu0
    %945 = vmatprep.mubr.f32.mxu0 0.0
    %946 = vmatmul.mubr.f32.gmra.mxu0 %v546
    %v947 = vpop.f32.mrf.mxu0
    %v948 = vadd.f32 0.0, %v947
    %v949 = vpop.f32.mrf.mxu0
    %950 = vmatprep.mubr.f32.mxu0 0.0
    %951 = vmatmul.mubr.f32.gmra.mxu0 %v549
    %v952 = vpop.f32.mrf.mxu0
    %v953 = vadd.f32 0.0, %v952
    %v954 = vpop.f32.mrf.mxu0
    %955 = vmatprep.mubr.f32.mxu0 0.0
    %956 = vmatmul.mubr.f32.gmra.mxu0 %v552
    %v957 = vpop.f32.mrf.mxu0
    %v958 = vadd.f32 0.0, %v957
    %v959 = vpop.f32.mrf.mxu0
    %960 = vmatprep.mubr.f32.mxu0 0.0
    %961 = vmatmul.mubr.f32.gmra.mxu0 %v555
    %v962 = vpop.f32.mrf.mxu0
    %v963 = vadd.f32 0.0, %v962
    %v964 = vpop.f32.mrf.mxu0
    %965 = vmatprep.mubr.f32.mxu0 0.0
    %966 = vmatmul.mubr.f32.gmra.mxu0 %v558
    %v967 = vpop.f32.mrf.mxu0
    %v968 = vadd.f32 0.0, %v967
    %v969 = vpop.f32.mrf.mxu0
    %970 = vmatprep.mubr.f32.mxu0 0.0
    %971 = vmatmul.mubr.f32.gmra.mxu0 %v561
    %v972 = vpop.f32.mrf.mxu0
    %v973 = vadd.f32 0.0, %v972
    %v974 = vpop.f32.mrf.mxu0
    %975 = vmatprep.mubr.f32.mxu0 0.0
    %976 = vmatmul.mubr.f32.gmra.mxu0 %v564
    %v977 = vpop.f32.mrf.mxu0
    %v978 = vadd.f32 0.0, %v977
    %v979 = vpop.f32.mrf.mxu0
    %980 = vmatprep.mubr.f32.mxu0 0.0
    %981 = vmatmul.mubr.f32.gmra.mxu0 %v567
    %v982 = vpop.f32.mrf.mxu0
    %v983 = vadd.f32 0.0, %v982
    %v984 = vpop.f32.mrf.mxu0
    %985 = vmatprep.mubr.f32.mxu0 0.0
    %986 = vmatmul.mubr.f32.gmra.mxu0 %v570
    %v987 = vpop.f32.mrf.mxu0
    %v988 = vadd.f32 0.0, %v987
    %v989 = vpop.f32.mrf.mxu0
    %990 = vmatprep.mubr.f32.mxu0 0.0
    %991 = vmatmul.mubr.f32.gmra.mxu0 %v573
    %v992 = vpop.f32.mrf.mxu0
    %v993 = vadd.f32 0.0, %v992
    %v994 = vpop.f32.mrf.mxu0
    %995 = vmatprep.mubr.f32.mxu0 0.0
    %996 = vmatmul.mubr.f32.gmra.mxu0 %v576
    %v997 = vpop.f32.mrf.mxu0
    %v998 = vadd.f32 0.0, %v997
    %v999 = vpop.f32.mrf.mxu0
    %1000 = vmatprep.mubr.f32.mxu0 0.0
    %1001 = vmatmul.mubr.f32.gmra.mxu0 %v579
    %v1002 = vpop.f32.mrf.mxu0
    %v1003 = vadd.f32 0.0, %v1002
    %v1004 = vpop.f32.mrf.mxu0
    %1005 = vmatprep.mubr.f32.mxu0 0.0
    %1006 = vmatmul.mubr.f32.gmra.mxu0 %v582
    %v1007 = vpop.f32.mrf.mxu0
    %v1008 = vadd.f32 0.0, %v1007
    %v1009 = vpop.f32.mrf.mxu0
    %1010 = vmatprep.mubr.f32.mxu0 0.0
    %1011 = vmatmul.mubr.f32.gmra.mxu0 %v585
    %v1012 = vpop.f32.mrf.mxu0
    %v1013 = vadd.f32 0.0, %v1012
    %v1014 = vpop.f32.mrf.mxu0
    %1015 = vmatprep.mubr.f32.mxu0 0.0
    %1016 = vmatmul.mubr.f32.gmra.mxu0 %v588
    %v1017 = vpop.f32.mrf.mxu0
    %v1018 = vadd.f32 0.0, %v1017
    %v1019 = vpop.f32.mrf.mxu0
    %1020 = vmatprep.mubr.f32.mxu0 0.0
    %1021 = vmatmul.mubr.f32.gmra.mxu0 %v591
    %v1022 = vpop.f32.mrf.mxu0
    %v1023 = vadd.f32 0.0, %v1022
    %v1024 = vpop.f32.mrf.mxu0
    %1025 = vmatprep.mubr.f32.mxu0 0.0
    %1026 = vmatmul.mubr.f32.gmra.mxu0 %v594
    %v1027 = vpop.f32.mrf.mxu0
    %v1028 = vadd.f32 0.0, %v1027
    %v1029 = vpop.f32.mrf.mxu0
    %1030 = vmatprep.mubr.f32.mxu0 0.0
    %1031 = vmatmul.mubr.f32.gmra.mxu0 %v597
    %v1032 = vpop.f32.mrf.mxu0
    %v1033 = vadd.f32 0.0, %v1032
    %v1034 = vpop.f32.mrf.mxu0
    %1035 = vmatprep.mubr.f32.mxu0 0.0
    %1036 = vmatmul.mubr.f32.gmra.mxu0 %v600
    %v1037 = vpop.f32.mrf.mxu0
    %v1038 = vadd.f32 0.0, %v1037
    %v1039 = vpop.f32.mrf.mxu0
    %1040 = vmatprep.mubr.f32.mxu0 0.0
    %1041 = vmatmul.mubr.f32.gmra.mxu0 %v603
    %v1042 = vpop.f32.mrf.mxu0
    %v1043 = vadd.f32 0.0, %v1042
    %v1044 = vpop.f32.mrf.mxu0
    %1045 = vmatprep.mubr.f32.mxu0 0.0
    %1046 = vmatmul.mubr.f32.gmra.mxu0 %v606
    %v1047 = vpop.f32.mrf.mxu0
    %v1048 = vadd.f32 0.0, %v1047
    %v1049 = vpop.f32.mrf.mxu0
    %1050 = vmatprep.mubr.f32.mxu0 0.0
    %1051 = vmatmul.mubr.f32.gmra.mxu0 %v609
    %v1052 = vpop.f32.mrf.mxu0
    %v1053 = vadd.f32 0.0, %v1052
    %v1054 = vpop.f32.mrf.mxu0
    %1055 = vmatprep.mubr.f32.mxu0 0.0
    %1056 = vmatmul.mubr.f32.gmra.mxu0 %v612
    %v1057 = vpop.f32.mrf.mxu0
    %v1058 = vadd.f32 0.0, %v1057
    %v1059 = vpop.f32.mrf.mxu0
    %1060 = vmatprep.mubr.f32.mxu0 0.0
    %1061 = vmatmul.mubr.f32.gmra.mxu0 %v615
    %v1062 = vpop.f32.mrf.mxu0
    %v1063 = vadd.f32 0.0, %v1062
    %v1064 = vpop.f32.mrf.mxu0
    %1065 = vmatprep.mubr.f32.mxu0 0.0
    %1066 = vmatmul.mubr.f32.gmra.mxu0 %v618
    %v1067 = vpop.f32.mrf.mxu0
    %v1068 = vadd.f32 0.0, %v1067
    %v1069 = vpop.f32.mrf.mxu0
    %1070 = vmatprep.mubr.f32.mxu0 0.0
    %1071 = vmatmul.mubr.f32.gmra.mxu0 %v621
    %v1072 = vpop.f32.mrf.mxu0
    %v1073 = vadd.f32 0.0, %v1072
    %v1074 = vpop.f32.mrf.mxu0
    %1075 = vmatprep.mubr.f32.mxu0 0.0
    %1076 = vmatmul.mubr.f32.gmra.mxu0 %v624
    %v1077 = vpop.f32.mrf.mxu0
    %v1078 = vadd.f32 0.0, %v1077
    %v1079 = vpop.f32.mrf.mxu0
    %1080 = vmatprep.mubr.f32.mxu0 0.0
    %1081 = vmatmul.mubr.f32.gmra.mxu0 %v627
    %v1082 = vpop.f32.mrf.mxu0
    %v1083 = vadd.f32 0.0, %v1082
    %v1084 = vpop.f32.mrf.mxu0
    %1085 = vmatprep.mubr.f32.mxu0 0.0
    %1086 = vmatmul.mubr.f32.gmra.mxu0 %v630
    %v1087 = vpop.f32.mrf.mxu0
    %v1088 = vadd.f32 0.0, %v1087
    %v1089 = vpop.f32.mrf.mxu0
    %1090 = vmatprep.mubr.f32.mxu0 0.0
    %1091 = vmatmul.mubr.f32.gmra.mxu0 %v633
    %v1092 = vpop.f32.mrf.mxu0
    %v1093 = vadd.f32 0.0, %v1092
    %v1094 = vpop.f32.mrf.mxu0
    %1095 = vmatprep.mubr.f32.mxu0 0.0
    %1096 = vmatmul.mubr.f32.gmra.mxu0 %v636
    %v1097 = vpop.f32.mrf.mxu0
    %v1098 = vadd.f32 0.0, %v1097
    %v1099 = vpop.f32.mrf.mxu0
    %1100 = vmatprep.mubr.f32.mxu0 0.0
    %1101 = vmatmul.mubr.f32.gmra.mxu0 %v639
    %v1102 = vpop.f32.mrf.mxu0
    %v1103 = vadd.f32 0.0, %v1102
    %v1104 = vpop.f32.mrf.mxu0
    %1105 = vdwg.mxu0
    %v1106 = vmul.f32 %v708, %v708
    %v1107 = vmul.f32 %v713, %v713
    %v1108 = vmul.f32 %v718, %v718
    %v1109 = vmul.f32 %v723, %v723
    %v1110 = vmul.f32 %v728, %v728
    %v1111 = vmul.f32 %v733, %v733
    %v1112 = vmul.f32 %v738, %v738
    %v1113 = vmul.f32 %v743, %v743
    %v1114 = vmul.f32 %v748, %v748
    %v1115 = vmul.f32 %v753, %v753
    %v1116 = vmul.f32 %v758, %v758
    %v1117 = vmul.f32 %v763, %v763
    %v1118 = vmul.f32 %v768, %v768
    %v1119 = vmul.f32 %v773, %v773
    %v1120 = vmul.f32 %v778, %v778
    %v1121 = vmul.f32 %v783, %v783
    %v1122 = vmul.f32 %v788, %v788
    %v1123 = vmul.f32 %v793, %v793
    %v1124 = vmul.f32 %v798, %v798
    %v1125 = vmul.f32 %v803, %v803
    %v1126 = vmul.f32 %v808, %v808
    %v1127 = vmul.f32 %v813, %v813
    %v1128 = vmul.f32 %v818, %v818
    %v1129 = vmul.f32 %v823, %v823
    %v1130 = vmul.f32 %v828, %v828
    %v1131 = vmul.f32 %v833, %v833
    %v1132 = vmul.f32 %v838, %v838
    %v1133 = vmul.f32 %v843, %v843
    %v1134 = vmul.f32 %v848, %v848
    %v1135 = vmul.f32 %v853, %v853
    %v1136 = vmul.f32 %v858, %v858
    %v1137 = vmul.f32 %v863, %v863
    %v1138 = vmul.f32 %v708, %v788
    %v1139 = vmul.f32 %v713, %v793
    %v1140 = vmul.f32 %v718, %v798
    %v1141 = vmul.f32 %v723, %v803
    %v1142 = vmul.f32 %v728, %v808
    %v1143 = vmul.f32 %v733, %v813
    %v1144 = vmul.f32 %v738, %v818
    %v1145 = vmul.f32 %v743, %v823
    %v1146 = vmul.f32 %v748, %v828
    %v1147 = vmul.f32 %v753, %v833
    %v1148 = vmul.f32 %v758, %v838
    %v1149 = vmul.f32 %v763, %v843
    %v1150 = vmul.f32 %v768, %v848
    %v1151 = vmul.f32 %v773, %v853
    %v1152 = vmul.f32 %v778, %v858
    %v1153 = vmul.f32 %v783, %v863
    %v1154 = vsub.f32 %v868, %v1106
    %v1155 = vsub.f32 %v873, %v1107
    %v1156 = vsub.f32 %v878, %v1108
    %v1157 = vsub.f32 %v883, %v1109
    %v1158 = vsub.f32 %v888, %v1110
    %v1159 = vsub.f32 %v893, %v1111
    %v1160 = vsub.f32 %v898, %v1112
    %v1161 = vsub.f32 %v903, %v1113
    %v1162 = vsub.f32 %v908, %v1114
    %v1163 = vsub.f32 %v913, %v1115
    %v1164 = vsub.f32 %v918, %v1116
    %v1165 = vsub.f32 %v923, %v1117
    %v1166 = vsub.f32 %v928, %v1118
    %v1167 = vsub.f32 %v933, %v1119
    %v1168 = vsub.f32 %v938, %v1120
    %v1169 = vsub.f32 %v943, %v1121
    %v1170 = vsub.f32 %v948, %v1122
    %v1171 = vsub.f32 %v953, %v1123
    %v1172 = vsub.f32 %v958, %v1124
    %v1173 = vsub.f32 %v963, %v1125
    %v1174 = vsub.f32 %v968, %v1126
    %v1175 = vsub.f32 %v973, %v1127
    %v1176 = vsub.f32 %v978, %v1128
    %v1177 = vsub.f32 %v983, %v1129
    %v1178 = vsub.f32 %v988, %v1130
    %v1179 = vsub.f32 %v993, %v1131
    %v1180 = vsub.f32 %v998, %v1132
    %v1181 = vsub.f32 %v1003, %v1133
    %v1182 = vsub.f32 %v1008, %v1134
    %v1183 = vsub.f32 %v1013, %v1135
    %v1184 = vsub.f32 %v1018, %v1136
    %v1185 = vsub.f32 %v1023, %v1137
    %v1186 = vsub.f32 %v1028, %v1138
    %v1187 = vsub.f32 %v1033, %v1139
    %v1188 = vsub.f32 %v1038, %v1140
    %v1189 = vsub.f32 %v1043, %v1141
    %v1190 = vsub.f32 %v1048, %v1142
    %v1191 = vsub.f32 %v1053, %v1143
    %v1192 = vsub.f32 %v1058, %v1144
    %v1193 = vsub.f32 %v1063, %v1145
    %v1194 = vsub.f32 %v1068, %v1146
    %v1195 = vsub.f32 %v1073, %v1147
    %v1196 = vsub.f32 %v1078, %v1148
    %v1197 = vsub.f32 %v1083, %v1149
    %v1198 = vsub.f32 %v1088, %v1150
    %v1199 = vsub.f32 %v1093, %v1151
    %v1200 = vsub.f32 %v1098, %v1152
    %v1201 = vsub.f32 %v1103, %v1153
    %v1202 = vmul.f32 %v1138, 2.0
    %v1203 = vmul.f32 %v1139, 2.0
    %v1204 = vmul.f32 %v1140, 2.0
    %v1205 = vmul.f32 %v1141, 2.0
    %v1206 = vmul.f32 %v1142, 2.0
    %v1207 = vmul.f32 %v1143, 2.0
    %v1208 = vmul.f32 %v1144, 2.0
    %v1209 = vmul.f32 %v1145, 2.0
    %v1210 = vmul.f32 %v1146, 2.0
    %v1211 = vmul.f32 %v1147, 2.0
    %v1212 = vmul.f32 %v1148, 2.0
    %v1213 = vmul.f32 %v1149, 2.0
    %v1214 = vmul.f32 %v1150, 2.0
    %v1215 = vmul.f32 %v1151, 2.0
    %v1216 = vmul.f32 %v1152, 2.0
    %v1217 = vmul.f32 %v1153, 2.0
    %v1218 = vadd.f32 %v1202, 0.0001
    %v1219 = vadd.f32 %v1203, 0.0001
    %v1220 = vadd.f32 %v1204, 0.0001
    %v1221 = vadd.f32 %v1205, 0.0001
    %v1222 = vadd.f32 %v1206, 0.0001
    %v1223 = vadd.f32 %v1207, 0.0001
    %v1224 = vadd.f32 %v1208, 0.0001
    %v1225 = vadd.f32 %v1209, 0.0001
    %v1226 = vadd.f32 %v1210, 0.0001
    %v1227 = vadd.f32 %v1211, 0.0001
    %v1228 = vadd.f32 %v1212, 0.0001
    %v1229 = vadd.f32 %v1213, 0.0001
    %v1230 = vadd.f32 %v1214, 0.0001
    %v1231 = vadd.f32 %v1215, 0.0001
    %v1232 = vadd.f32 %v1216, 0.0001
    %v1233 = vadd.f32 %v1217, 0.0001
    %v1234 = vmul.f32 %v1186, 2.0
    %v1235 = vmul.f32 %v1187, 2.0
    %v1236 = vmul.f32 %v1188, 2.0
    %v1237 = vmul.f32 %v1189, 2.0
    %v1238 = vmul.f32 %v1190, 2.0
    %v1239 = vmul.f32 %v1191, 2.0
    %v1240 = vmul.f32 %v1192, 2.0
    %v1241 = vmul.f32 %v1193, 2.0
    %v1242 = vmul.f32 %v1194, 2.0
    %v1243 = vmul.f32 %v1195, 2.0
    %v1244 = vmul.f32 %v1196, 2.0
    %v1245 = vmul.f32 %v1197, 2.0
    %v1246 = vmul.f32 %v1198, 2.0
    %v1247 = vmul.f32 %v1199, 2.0
    %v1248 = vmul.f32 %v1200, 2.0
    %v1249 = vmul.f32 %v1201, 2.0
    %v1250 = vadd.f32 %v1234, 0.0009
    %v1251 = vadd.f32 %v1235, 0.0009
    %v1252 = vadd.f32 %v1236, 0.0009
    %v1253 = vadd.f32 %v1237, 0.0009
    %v1254 = vadd.f32 %v1238, 0.0009
    %v1255 = vadd.f32 %v1239, 0.0009
    %v1256 = vadd.f32 %v1240, 0.0009
    %v1257 = vadd.f32 %v1241, 0.0009
    %v1258 = vadd.f32 %v1242, 0.0009
    %v1259 = vadd.f32 %v1243, 0.0009
    %v1260 = vadd.f32 %v1244, 0.0009
    %v1261 = vadd.f32 %v1245, 0.0009
    %v1262 = vadd.f32 %v1246, 0.0009
    %v1263 = vadd.f32 %v1247, 0.0009
    %v1264 = vadd.f32 %v1248, 0.0009
    %v1265 = vadd.f32 %v1249, 0.0009
    %v1266 = vmul.f32 %v1218, %v1250
    %v1267 = vmul.f32 %v1219, %v1251
    %v1268 = vmul.f32 %v1220, %v1252
    %v1269 = vmul.f32 %v1221, %v1253
    %v1270 = vmul.f32 %v1222, %v1254
    %v1271 = vmul.f32 %v1223, %v1255
    %v1272 = vmul.f32 %v1224, %v1256
    %v1273 = vmul.f32 %v1225, %v1257
    %v1274 = vmul.f32 %v1226, %v1258
    %v1275 = vmul.f32 %v1227, %v1259
    %v1276 = vmul.f32 %v1228, %v1260
    %v1277 = vmul.f32 %v1229, %v1261
    %v1278 = vmul.f32 %v1230, %v1262
    %v1279 = vmul.f32 %v1231, %v1263
    %v1280 = vmul.f32 %v1232, %v1264
    %v1281 = vmul.f32 %v1233, %v1265
    %v1282 = vadd.f32 %v1106, %v1122
    %v1283 = vadd.f32 %v1107, %v1123
    %v1284 = vadd.f32 %v1108, %v1124
    %v1285 = vadd.f32 %v1109, %v1125
    %v1286 = vadd.f32 %v1110, %v1126
    %v1287 = vadd.f32 %v1111, %v1127
    %v1288 = vadd.f32 %v1112, %v1128
    %v1289 = vadd.f32 %v1113, %v1129
    %v1290 = vadd.f32 %v1114, %v1130
    %v1291 = vadd.f32 %v1115, %v1131
    %v1292 = vadd.f32 %v1116, %v1132
    %v1293 = vadd.f32 %v1117, %v1133
    %v1294 = vadd.f32 %v1118, %v1134
    %v1295 = vadd.f32 %v1119, %v1135
    %v1296 = vadd.f32 %v1120, %v1136
    %v1297 = vadd.f32 %v1121, %v1137
    %v1298 = vadd.f32 %v1282, 0.0001
    %v1299 = vadd.f32 %v1283, 0.0001
    %v1300 = vadd.f32 %v1284, 0.0001
    %v1301 = vadd.f32 %v1285, 0.0001
    %v1302 = vadd.f32 %v1286, 0.0001
    %v1303 = vadd.f32 %v1287, 0.0001
    %v1304 = vadd.f32 %v1288, 0.0001
    %v1305 = vadd.f32 %v1289, 0.0001
    %v1306 = vadd.f32 %v1290, 0.0001
    %v1307 = vadd.f32 %v1291, 0.0001
    %v1308 = vadd.f32 %v1292, 0.0001
    %v1309 = vadd.f32 %v1293, 0.0001
    %v1310 = vadd.f32 %v1294, 0.0001
    %v1311 = vadd.f32 %v1295, 0.0001
    %v1312 = vadd.f32 %v1296, 0.0001
    %v1313 = vadd.f32 %v1297, 0.0001
    %v1314 = vadd.f32 %v1154, %v1170
    %v1315 = vadd.f32 %v1155, %v1171
    %v1316 = vadd.f32 %v1156, %v1172
    %v1317 = vadd.f32 %v1157, %v1173
    %v1318 = vadd.f32 %v1158, %v1174
    %v1319 = vadd.f32 %v1159, %v1175
    %v1320 = vadd.f32 %v1160, %v1176
    %v1321 = vadd.f32 %v1161, %v1177
    %v1322 = vadd.f32 %v1162, %v1178
    %v1323 = vadd.f32 %v1163, %v1179
    %v1324 = vadd.f32 %v1164, %v1180
    %v1325 = vadd.f32 %v1165, %v1181
    %v1326 = vadd.f32 %v1166, %v1182
    %v1327 = vadd.f32 %v1167, %v1183
    %v1328 = vadd.f32 %v1168, %v1184
    %v1329 = vadd.f32 %v1169, %v1185
    %v1330 = vadd.f32 %v1314, 0.0009
    %v1331 = vadd.f32 %v1315, 0.0009
    %v1332 = vadd.f32 %v1316, 0.0009
    %v1333 = vadd.f32 %v1317, 0.0009
    %v1334 = vadd.f32 %v1318, 0.0009
    %v1335 = vadd.f32 %v1319, 0.0009
    %v1336 = vadd.f32 %v1320, 0.0009
    %v1337 = vadd.f32 %v1321, 0.0009
    %v1338 = vadd.f32 %v1322, 0.0009
    %v1339 = vadd.f32 %v1323, 0.0009
    %v1340 = vadd.f32 %v1324, 0.0009
    %v1341 = vadd.f32 %v1325, 0.0009
    %v1342 = vadd.f32 %v1326, 0.0009
    %v1343 = vadd.f32 %v1327, 0.0009
    %v1344 = vadd.f32 %v1328, 0.0009
    %v1345 = vadd.f32 %v1329, 0.0009
    %v1346 = vmul.f32 %v1298, %v1330
    %v1347 = vmul.f32 %v1299, %v1331
    %v1348 = vmul.f32 %v1300, %v1332
    %v1349 = vmul.f32 %v1301, %v1333
    %v1350 = vmul.f32 %v1302, %v1334
    %v1351 = vmul.f32 %v1303, %v1335
    %v1352 = vmul.f32 %v1304, %v1336
    %v1353 = vmul.f32 %v1305, %v1337
    %v1354 = vmul.f32 %v1306, %v1338
    %v1355 = vmul.f32 %v1307, %v1339
    %v1356 = vmul.f32 %v1308, %v1340
    %v1357 = vmul.f32 %v1309, %v1341
    %v1358 = vmul.f32 %v1310, %v1342
    %v1359 = vmul.f32 %v1311, %v1343
    %v1360 = vmul.f32 %v1312, %v1344
    %v1361 = vmul.f32 %v1313, %v1345
    %v1362 = vrcp.pop %v1346
    %v1363 = vrcp.pop %v1347
    %v1364 = vrcp.pop %v1348
    %v1365 = vrcp.pop %v1349
    %v1366 = vrcp.pop %v1350
    %v1367 = vrcp.pop %v1351
    %v1368 = vrcp.pop %v1352
    %v1369 = vrcp.pop %v1353
    %v1370 = vrcp.pop %v1354
    %v1371 = vrcp.pop %v1355
    %v1372 = vrcp.pop %v1356
    %v1373 = vrcp.pop %v1357
    %v1374 = vrcp.pop %v1358
    %v1375 = vrcp.pop %v1359
    %v1376 = vrcp.pop %v1360
    %v1377 = vrcp.pop %v1361
    %v1378 = vmul.f32 %v1346, %v1362
    %v1379 = vmul.f32 %v1347, %v1363
    %v1380 = vmul.f32 %v1348, %v1364
    %v1381 = vmul.f32 %v1349, %v1365
    %v1382 = vmul.f32 %v1350, %v1366
    %v1383 = vmul.f32 %v1351, %v1367
    %v1384 = vmul.f32 %v1352, %v1368
    %v1385 = vmul.f32 %v1353, %v1369
    %v1386 = vmul.f32 %v1354, %v1370
    %v1387 = vmul.f32 %v1355, %v1371
    %v1388 = vmul.f32 %v1356, %v1372
    %v1389 = vmul.f32 %v1357, %v1373
    %v1390 = vmul.f32 %v1358, %v1374
    %v1391 = vmul.f32 %v1359, %v1375
    %v1392 = vmul.f32 %v1360, %v1376
    %v1393 = vmul.f32 %v1361, %v1377
    %v1394 = vsub.f32 2.0, %v1378
    %v1395 = vsub.f32 2.0, %v1379
    %v1396 = vsub.f32 2.0, %v1380
    %v1397 = vsub.f32 2.0, %v1381
    %v1398 = vsub.f32 2.0, %v1382
    %v1399 = vsub.f32 2.0, %v1383
    %v1400 = vsub.f32 2.0, %v1384
    %v1401 = vsub.f32 2.0, %v1385
    %v1402 = vsub.f32 2.0, %v1386
    %v1403 = vsub.f32 2.0, %v1387
    %v1404 = vsub.f32 2.0, %v1388
    %v1405 = vsub.f32 2.0, %v1389
    %v1406 = vsub.f32 2.0, %v1390
    %v1407 = vsub.f32 2.0, %v1391
    %v1408 = vsub.f32 2.0, %v1392
    %v1409 = vsub.f32 2.0, %v1393
    %v1410 = vmul.f32 %v1362, %v1394
    %v1411 = vmul.f32 %v1363, %v1395
    %v1412 = vmul.f32 %v1364, %v1396
    %v1413 = vmul.f32 %v1365, %v1397
    %v1414 = vmul.f32 %v1366, %v1398
    %v1415 = vmul.f32 %v1367, %v1399
    %v1416 = vmul.f32 %v1368, %v1400
    %v1417 = vmul.f32 %v1369, %v1401
    %v1418 = vmul.f32 %v1370, %v1402
    %v1419 = vmul.f32 %v1371, %v1403
    %v1420 = vmul.f32 %v1372, %v1404
    %v1421 = vmul.f32 %v1373, %v1405
    %v1422 = vmul.f32 %v1374, %v1406
    %v1423 = vmul.f32 %v1375, %v1407
    %v1424 = vmul.f32 %v1376, %v1408
    %v1425 = vmul.f32 %v1377, %v1409
    %v1426 = vmul.f32 %v1266, %v1410
    %v1427 = vmul.f32 %v1267, %v1411
    %v1428 = vmul.f32 %v1268, %v1412
    %v1429 = vmul.f32 %v1269, %v1413
    %v1430 = vmul.f32 %v1270, %v1414
    %v1431 = vmul.f32 %v1271, %v1415
    %v1432 = vmul.f32 %v1272, %v1416
    %v1433 = vmul.f32 %v1273, %v1417
    %v1434 = vmul.f32 %v1274, %v1418
    %v1435 = vmul.f32 %v1275, %v1419
    %v1436 = vmul.f32 %v1276, %v1420
    %v1437 = vmul.f32 %v1277, %v1421
    %v1438 = vmul.f32 %v1278, %v1422
    %v1439 = vmul.f32 %v1279, %v1423
    %v1440 = vmul.f32 %v1280, %v1424
    %v1441 = vmul.f32 %v1281, %v1425
    %v1442 = vsel %vm400, %v1426, 0.0
    %1443 = vadd.xlane.f32.xlu0 %v1442
    %v1444 = vpop.xlane.xlu0 %1443
    %v1445 = vsel %vm400, %v1427, 0.0
    %1446 = vadd.xlane.f32.xlu0 %v1445
    %v1447 = vpop.xlane.xlu0 %1446
    %v1448 = vsel %vm400, %v1428, 0.0
    %1449 = vadd.xlane.f32.xlu0 %v1448
    %v1450 = vpop.xlane.xlu0 %1449
    %v1451 = vsel %vm400, %v1429, 0.0
    %1452 = vadd.xlane.f32.xlu0 %v1451
    %v1453 = vpop.xlane.xlu0 %1452
    %v1454 = vsel %vm400, %v1430, 0.0
    %1455 = vadd.xlane.f32.xlu0 %v1454
    %v1456 = vpop.xlane.xlu0 %1455
    %v1457 = vsel %vm400, %v1431, 0.0
    %1458 = vadd.xlane.f32.xlu0 %v1457
    %v1459 = vpop.xlane.xlu0 %1458
    %v1460 = vsel %vm400, %v1432, 0.0
    %1461 = vadd.xlane.f32.xlu0 %v1460
    %v1462 = vpop.xlane.xlu0 %1461
    %v1463 = vsel %vm400, %v1433, 0.0
    %1464 = vadd.xlane.f32.xlu0 %v1463
    %v1465 = vpop.xlane.xlu0 %1464
    %v1466 = vsel %vm400, %v1434, 0.0
    %1467 = vadd.xlane.f32.xlu0 %v1466
    %v1468 = vpop.xlane.xlu0 %1467
    %v1469 = vsel %vm400, %v1435, 0.0
    %1470 = vadd.xlane.f32.xlu0 %v1469
    %v1471 = vpop.xlane.xlu0 %1470
    %v1472 = vsel %vm400, %v1436, 0.0
    %1473 = vadd.xlane.f32.xlu0 %v1472
    %v1474 = vpop.xlane.xlu0 %1473
    %v1475 = vsel %vm400, %v1437, 0.0
    %1476 = vadd.xlane.f32.xlu0 %v1475
    %v1477 = vpop.xlane.xlu0 %1476
    %v1478 = vsel %vm400, %v1438, 0.0
    %1479 = vadd.xlane.f32.xlu0 %v1478
    %v1480 = vpop.xlane.xlu0 %1479
    %v1481 = vsel %vm400, %v1439, 0.0
    %1482 = vadd.xlane.f32.xlu0 %v1481
    %v1483 = vpop.xlane.xlu0 %1482
    %v1484 = vsel %vm400, %v1440, 0.0
    %1485 = vadd.xlane.f32.xlu0 %v1484
    %v1486 = vpop.xlane.xlu0 %1485
    %v1487 = vsel %vm400, %v1441, 0.0
    %1488 = vadd.xlane.f32.xlu0 %v1487
    %v1489 = vpop.xlane.xlu0 %1488
    %v1506 = vlaneseq
    %v1507 = vand.u32 %v1506, 127
    %v1508 = vlaneseq
    %v1509 = vshrl.u32 %v1508, 7
    %v1510 = vsub.s32 %v1507, %v1509
    %v1511 = vrot.slane %v1444, %v1510
    %v1512 = vadd.s32 %v1507, 4294967288
    %v1513 = vlaneseq
    %v1514 = vshrl.u32 %v1513, 7
    %v1515 = vsub.s32 %v1512, %v1514
    %v1516 = vrot.slane %v1447, %v1515
    %vm1517 = vcmask 130112
    %v1518 = vsel %vm1517, %v1516, %v1511
    %v1519 = vlaneseq
    %v1520 = vshrl.u32 %v1519, 7
    %v1521 = vsub.s32 %v1507, %v1520
    %v1522 = vrot.slane %v1450, %v1521
    %v1523 = vlaneseq
    %v1524 = vshrl.u32 %v1523, 7
    %v1525 = vsub.s32 %v1512, %v1524
    %v1526 = vrot.slane %v1453, %v1525
    %v1527 = vsel %vm1517, %v1526, %v1522
    %v1528 = vlaneseq
    %v1529 = vshrl.u32 %v1528, 7
    %v1530 = vsub.s32 %v1507, %v1529
    %v1531 = vrot.slane %v1456, %v1530
    %v1532 = vlaneseq
    %v1533 = vshrl.u32 %v1532, 7
    %v1534 = vsub.s32 %v1512, %v1533
    %v1535 = vrot.slane %v1459, %v1534
    %v1536 = vsel %vm1517, %v1535, %v1531
    %v1537 = vlaneseq
    %v1538 = vshrl.u32 %v1537, 7
    %v1539 = vsub.s32 %v1507, %v1538
    %v1540 = vrot.slane %v1462, %v1539
    %v1541 = vlaneseq
    %v1542 = vshrl.u32 %v1541, 7
    %v1543 = vsub.s32 %v1512, %v1542
    %v1544 = vrot.slane %v1465, %v1543
    %v1545 = vsel %vm1517, %v1544, %v1540
    %v1546 = vlaneseq
    %v1547 = vshrl.u32 %v1546, 7
    %v1548 = vsub.s32 %v1507, %v1547
    %v1549 = vrot.slane %v1468, %v1548
    %v1550 = vlaneseq
    %v1551 = vshrl.u32 %v1550, 7
    %v1552 = vsub.s32 %v1512, %v1551
    %v1553 = vrot.slane %v1471, %v1552
    %v1554 = vsel %vm1517, %v1553, %v1549
    %v1555 = vlaneseq
    %v1556 = vshrl.u32 %v1555, 7
    %v1557 = vsub.s32 %v1507, %v1556
    %v1558 = vrot.slane %v1474, %v1557
    %v1559 = vlaneseq
    %v1560 = vshrl.u32 %v1559, 7
    %v1561 = vsub.s32 %v1512, %v1560
    %v1562 = vrot.slane %v1477, %v1561
    %v1563 = vsel %vm1517, %v1562, %v1558
    %v1564 = vlaneseq
    %v1565 = vshrl.u32 %v1564, 7
    %v1566 = vsub.s32 %v1507, %v1565
    %v1567 = vrot.slane %v1480, %v1566
    %v1568 = vlaneseq
    %v1569 = vshrl.u32 %v1568, 7
    %v1570 = vsub.s32 %v1512, %v1569
    %v1571 = vrot.slane %v1483, %v1570
    %v1572 = vsel %vm1517, %v1571, %v1567
    %v1573 = vlaneseq
    %v1574 = vshrl.u32 %v1573, 7
    %v1575 = vsub.s32 %v1507, %v1574
    %v1576 = vrot.slane %v1486, %v1575
    %v1577 = vlaneseq
    %v1578 = vshrl.u32 %v1577, 7
    %v1579 = vsub.s32 %v1512, %v1578
    %v1580 = vrot.slane %v1489, %v1579
    %v1581 = vsel %vm1517, %v1580, %v1576
    %vm1582 = vcmask 1041409
    %v1583 = vsel %vm1582, %v1527, %v1518
    %vm1584 = vcmask 1042434
    %v1585 = vsel %vm1584, %v1536, %v1583
    %vm1586 = vcmask 1043459
    %v1587 = vsel %vm1586, %v1545, %v1585
    %vm1588 = vcmask 1044484
    %v1589 = vsel %vm1588, %v1554, %v1587
    %vm1590 = vcmask 1045509
    %v1591 = vsel %vm1590, %v1563, %v1589
    %vm1592 = vcmask 1046534
    %v1593 = vsel %vm1592, %v1572, %v1591
    %vm1594 = vcmask 1047559
    %v1595 = vsel %vm1594, %v1581, %v1593
    %v1597 = vsel %vm400, %v1595, 0.0
    %1598 = vadd.xlane.f32.xlu0 %v1597
    %v1599 = vpop.xlane.xlu0 %1598
    %v1601 = vlaneseq
    %v1602 = vshrl.u32 %v1601, 7
    %v1603 = vsub.s32 %v1507, %v1602
    %v1604 = vrot.slane %v1599, %v1603
    %vm1606 = vcmask 57344
    %1607 = vst.msk [vmem:[#allocation11] sm:$0x1] %vm1606, %v1604
    // Predicated region
    $region34: #{tpu_custom_call.1} parent=1 // pred_check
      _
    $region35: #{tpu_custom_call.1} parent=1 // pred_check_branch
      %1609 = sbr.rel (0) target = $region37
    $region36: #{tpu_custom_call.1} parent=1 // pred_region
      %s1611 = ssub.s32 16, 16
      %1612 = vsyncadd [#allocation5], %s1611
      %s1614 = sshll.u32 [#allocation11], 4
      %s1615 = int_to_ptr.vmem [resolvable:$true] %s1614
      %1617 = dma.vmem_to_hbm [thread:$0]  %s1615, 16, %s4, [#allocation5]
    $region37: #{tpu_custom_call.1} parent=1 // pred_fallthru
      _
    // Predicated region
    $region38: #{tpu_custom_call.1} parent=1 // pred_check
      _
    $region39: #{tpu_custom_call.1} parent=1 // pred_check_branch
      %1619 = sbr.rel (0) target = $region41
    $region40: #{tpu_custom_call.1} parent=1 // pred_region
      %1620 = dma.done [#allocation5], 16
    $region41: #{tpu_custom_call.1} parent=1 // pred_fallthru
      _
    %1621 = vsyncpa [#allocation4], 1
    %1622 = vsyncpa [#allocation7], 1
    %1623 = vsyncpa [#allocation10], 1
    %1624 = vsyncpa [#allocation5], 1

</llo_original>
